<compile_context>
chip_gen: v7x
topology: tpu7x:2x2x1
jax: 0.10.0
libtpu: 0.0.40
codegen_flags: <defaults>
</compile_context>

<pallas_src>
import functools
import math

import jax
import jax.numpy as jnp
from jax.experimental import pallas as pl
from jax.experimental.pallas import tpu as pltpu

LANE = 128


def _round_up(n, m):
    return ((n + m - 1) // m) * m


def _sigmoid(x):
    # sigmoid(x) == 0.5*(tanh(0.5*x)+1): one EUP transcendental instead of exp+divide.
    return 0.5 * (jnp.tanh(0.5 * x) + 1.0)


# --------------------------------------------------------------------------- kernel


def _gru_time_block_kernel(gx_ref, whh_ref, bhhn_ref, h0_ref,
                           out_ref, hN_ref, h_scratch, *, unroll):
    # gx_ref:   (T, BT, 3Hp)  streamed precomputed gate inputs (bf16 or f32)
    # whh_ref:  (Hp, 3Hp)     resident hidden->hidden weights, gates (r|z|n)
    # bhhn_ref: (1, Hp) f32   n-gate hidden bias (stays inside the r-gated term)
    # h0_ref:   (1, BT, Hp)   initial hidden state for this batch block
    # out_ref:  (T, BT, Hp)   per-step outputs for this (batch, time) block
    # hN_ref:   (1, BT, Hp)   final hidden state (written on last time block only)
    # h_scratch:(BT, Hp) f32  recurrent carry across time blocks
    tb = pl.program_id(1)

    @pl.when(tb == 0)
    def _():
        h_scratch[...] = h0_ref[0].astype(jnp.float32)

    T = out_ref.shape[0]
    Hp = whh_ref.shape[0]
    w_hh = whh_ref[...]           # hoisted: loaded once per time block (bf16 resident)
    b_hh_n = bhhn_ref[...]        # (1, Hp) hoisted: no per-iter broadcast_in_dim

    def step(t, h):
        gx = gx_ref[t].astype(jnp.float32)                     # (BT, 3Hp), f32 gating math
        # One MXU push per step; bf16xbf16 -> f32 accumulate avoids f32 multi-pass.
        hh = jnp.dot(h.astype(w_hh.dtype), w_hh,
                     preferred_element_type=jnp.float32)        # (BT, 3Hp)
        # Hp is a multiple of 128 => all gate slices are lane-tile aligned (free views).
        r = _sigmoid(gx[:, :Hp] + hh[:, :Hp])
        z = _sigmoid(gx[:, Hp:2 * Hp] + hh[:, Hp:2 * Hp])
        n = jnp.tanh(gx[:, 2 * Hp:] + r * (hh[:, 2 * Hp:] + b_hh_n))
        h_new = (1.0 - z) * n + z * h
        out_ref[t] = h_new.astype(out_ref.dtype)                # lane-dense store
        return h_new

    h_final = jax.lax.fori_loop(0, T, step, h_scratch[...], unroll=unroll)
    h_scratch[...] = h_final

    @pl.when(tb == pl.num_programs(1) - 1)
    def _():
        hN_ref[0] = h_final.astype(hN_ref.dtype)


# ------------------------------------------------------------------ capability probes


def _probe_kernel(x_ref, o_ref):
    o_ref[...] = x_ref[...]


@functools.lru_cache(maxsize=1)
def _single_buffer_supported():
    """One-time feature check: can this build lower pipeline_mode=pl.Buffered(1)?

    This replaces the previous blanket try/except around the real kernel build, so
    genuine compile errors (e.g. VMEM overflow) on the main kernel now propagate.
    """
    try:
        spec = pl.BlockSpec((8, LANE), lambda i: (0, 0), pipeline_mode=pl.Buffered(1))
        fn = pl.pallas_call(
            _probe_kernel,
            out_shape=jax.ShapeDtypeStruct((8, LANE), jnp.float32),
            grid=(2,),
            in_specs=[spec],
            out_specs=pl.BlockSpec((8, LANE), lambda i: (0, 0)),
        )
        jax.block_until_ready(fn(jnp.zeros((8, LANE), jnp.float32)))
        return True
    except Exception:  # capability probe only; main kernel build has no fallback
        return False


def _vmem_capacity_bytes():
    try:
        return int(pltpu.get_tpu_info().vmem_capacity_bytes)
    except Exception:
        return 64 * 1024 * 1024  # conservative default (v7x per-core VMEM)


def _vmem_plan(S, BT, Hp, gx_bytes, whh_bytes, out_bytes, single_buffer, time_block=None):
    """Pick the time block T against the VMEM budget and an explicit vmem limit."""
    inv = 1 if single_buffer else 2
    fixed = (inv * (Hp * 3 * Hp * whh_bytes + Hp * 4)   # resident W_hh + b_hh_n
             + 2 * BT * Hp * 4                           # h0 block (default buffering)
             + 2 * BT * Hp * out_bytes                   # resident final-hidden out block
             + BT * Hp * 4)                              # f32 carry scratch
    per_t = 2 * BT * 3 * Hp * gx_bytes + 2 * BT * Hp * out_bytes   # streamed gx + out
    cap = _vmem_capacity_bytes()
    if time_block is None:
        budget = int(0.55 * cap)
        T = 1
        for cand in range(1, min(S, 64) + 1):
            if S % cand == 0 and fixed + cand * per_t <= budget:
                T = cand
    else:
        T = time_block
    usage = fixed + T * per_t
    vmem_limit = int(min(cap, max(32 * 1024 * 1024, 2 * usage)))
    return T, vmem_limit


# ------------------------------------------------------------------------ call builder


def _build_gru_call(S, B, Hp, T, BT, out_dtype, single_buffer, vmem_limit, unroll):
    def inv_spec(shape, idx):
        # Grid-invariant operand: single-buffer it when supported (double-buffering a
        # constant-index block wastes VMEM -- decisive on v7x's 64 MiB at large H).
        if single_buffer:
            return pl.BlockSpec(shape, idx, pipeline_mode=pl.Buffered(1))
        return pl.BlockSpec(shape, idx)

    grid_spec = pltpu.PrefetchScalarGridSpec(
        num_scalar_prefetch=0,
        grid=(B // BT, S // T),        # (batch blocks [parallel], time blocks [serial])
        in_specs=[
            pl.BlockSpec((T, BT, 3 * Hp), lambda bb, tb: (tb, bb, 0)),   # streamed gates
            inv_spec((Hp, 3 * Hp), lambda bb, tb: (0, 0)),               # W_hh (resident)
            inv_spec((1, Hp), lambda bb, tb: (0, 0)),                    # b_hh_n
            pl.BlockSpec((1, BT, Hp), lambda bb, tb: (0, bb, 0)),        # h0 per batch block
        ],
        out_specs=[
            pl.BlockSpec((T, BT, Hp), lambda bb, tb: (tb, bb, 0)),       # per-step outputs
            pl.BlockSpec((1, BT, Hp), lambda bb, tb: (0, bb, 0)),        # final hidden
        ],
        scratch_shapes=[pltpu.VMEM((BT, Hp), jnp.float32)],
    )
    out_shapes = (
        jax.ShapeDtypeStruct((S, B, Hp), out_dtype),
        jax.ShapeDtypeStruct((1, B, Hp), out_dtype),
    )
    return pl.pallas_call(
        functools.partial(_gru_time_block_kernel, unroll=unroll),
        out_shape=out_shapes,
        grid_spec=grid_spec,
        compiler_params=pltpu.CompilerParams(
            # batch blocks are independent (megacore on v7x); time is a serial recurrence
            dimension_semantics=("parallel", "arbitrary"),
            vmem_limit_bytes=vmem_limit,
        ),
    )


def gru_forward_pallas(gates_x, w_hh, b_hh_n, h0, *, time_block=None, batch_block=None,
                       out_dtype=jnp.float32):
    """Run the time-blocked GRU recurrence.

    gates_x: (S, B, 3*Hp)  precomputed x@W_ih + b_ih (+ r/z hidden biases), lane-padded
    w_hh:    (Hp, 3*Hp)    hidden->hidden weights, gates (r|z|n), lane-padded
    b_hh_n:  (1, Hp) f32   n-gate hidden bias
    h0:      (1, B, Hp)    initial hidden state
    """
    S, B, threeHp = gates_x.shape
    Hp = threeHp // 3
    assert w_hh.shape == (Hp, 3 * Hp)

    BT = B if batch_block is None else batch_block
    assert B % BT == 0 and (BT == B or BT % 8 == 0), \
        "batch_block must divide B and be sublane-aligned"

    single_buffer = _single_buffer_supported()
    T, vmem_limit = _vmem_plan(S, BT, Hp,
                               gates_x.dtype.itemsize, w_hh.dtype.itemsize,
                               jnp.dtype(out_dtype).itemsize,
                               single_buffer, time_block)
    assert S % T == 0, "time_block must divide the sequence length"
    unroll = min(T, 8)   # partial unroll: LLO visibility without blowing regalloc

    call = _build_gru_call(S, B, Hp, T, BT, out_dtype, single_buffer, vmem_limit, unroll)
    return call(gates_x, w_hh, b_hh_n, h0)


# --------------------------------------------------------------------------- module


def _pad_gate_cols(a, H, Hp):
    """(..., 3H) -> (..., 3Hp): zero-pad each gate (r|z|n) to lane-aligned width Hp."""
    if Hp == H:
        return a
    pad = [(0, 0)] * (a.ndim - 1) + [(0, Hp - H)]
    return jnp.concatenate([jnp.pad(a[..., :H], pad),
                            jnp.pad(a[..., H:2 * H], pad),
                            jnp.pad(a[..., 2 * H:], pad)], axis=-1)


class EncoderRNNPallas:
    """JAX/Pallas port of the PyTorch EncoderRNN (bidirectional=False, num_layers=1)."""

    def __init__(self, input_size, hidden_size, key, *, stream_dtype=jnp.bfloat16):
        # TODO(synk): bidirectional=True / num_layers>1 branches of the PyTorch module
        # are not implemented (default config only).
        self.hidden_size = hidden_size
        self.num_layers = 1
        self.stream_dtype = stream_dtype
        H = hidden_size
        Hp = _round_up(H, LANE)          # lane-align so gate slices / stores are tile-aligned
        self.Hp = Hp

        k_emb, k1, k2, k3, k4 = jax.random.split(key, 5)
        bound = 1.0 / math.sqrt(H)
        # nn.Embedding: N(0, 1)
        self.embedding = jax.random.normal(k_emb, (input_size, H), dtype=jnp.float32)
        # nn.GRU params: U(-1/sqrt(H), 1/sqrt(H)); gate order (r, z, n), stored
        # concatenated along the output dim as (H, 3H), pre-transposed for x @ W.
        self.w_ih = jax.random.uniform(k1, (H, 3 * H), jnp.float32, -bound, bound)
        self.w_hh = jax.random.uniform(k2, (H, 3 * H), jnp.float32, -bound, bound)
        self.b_ih = jax.random.uniform(k3, (3 * H,), jnp.float32, -bound, bound)
        self.b_hh = jax.random.uniform(k4, (3 * H,), jnp.float32, -bound, bound)

        # Lane-padded parameter views (padded lanes stay exactly zero through the GRU,
        # so slicing [..., :H] at the end recovers the unpadded semantics).
        bias_pre = self.b_ih + jnp.concatenate([self.b_hh[:2 * H],
                                                jnp.zeros((H,), jnp.float32)])
        self.w_ih_p = _pad_gate_cols(self.w_ih, H, Hp)                                  # (H, 3Hp)
        self.w_hh_p = jnp.pad(_pad_gate_cols(self.w_hh, H, Hp), ((0, Hp - H), (0, 0)))  # (Hp, 3Hp)
        self.bias_pre_p = _pad_gate_cols(bias_pre, H, Hp)                               # (3Hp,)
        self.b_hh_n_p = jnp.pad(self.b_hh[2 * H:], (0, Hp - H)).reshape(1, Hp)          # (1, Hp)

    def init_hidden(self, batch_size):
        return jnp.zeros((self.num_layers, batch_size, self.hidden_size), jnp.float32)

    def __call__(self, X, hidden, *, time_block=None, batch_block=None):
        # X: (seq, batch) int32 token ids; hidden: (1, batch, hidden)
        H, Hp = self.hidden_size, self.Hp
        # Gate table (vocab, 3Hp): replaces the (S*B,H)x(H,3H) GEMM + (S,B,H) embedded
        # activation round trip with one small GEMM + a gather. r/z hidden biases are
        # folded in; the n-gate hidden bias stays inside the r-gated term in the kernel.
        G = (jnp.dot(self.embedding, self.w_ih_p,
                     precision=jax.lax.Precision.HIGHEST)
             + self.bias_pre_p).astype(self.stream_dtype)
        # TODO(synk): the token -> table-row gather stays as XLA glue; a scalar-prefetch
        # + pl.Element gather inside the kernel would avoid the (S,B,3Hp) HBM stream.
        gates_x = jnp.take(G, X, axis=0)                               # (S, B, 3Hp)
        h0_p = jnp.pad(hidden, ((0, 0), (0, 0), (0, Hp - H))).astype(jnp.float32)
        w_hh_s = self.w_hh_p.astype(self.stream_dtype)
        # TODO(synk): for tiny batch, weight-stationary MXU driving via
        # pltpu.matmul_push_rhs/acc_lhs/pop would avoid re-streaming W_hh each step.
        out_p, hN_p = gru_forward_pallas(gates_x, w_hh_s, self.b_hh_n_p, h0_p,
                                         time_block=time_block, batch_block=batch_block)
        return out_p[:, :, :H], hN_p[:, :, :H]


# -------------------------------------------------------------------------- reference


def _gru_reference(x_emb, w_ih, w_hh, b_ih, b_hh, h0):
    """Pure-JAX scan reference of the same GRU (PyTorch gate semantics), f32 HIGHEST."""
    H = w_hh.shape[0]
    hp = jax.lax.Precision.HIGHEST

    def step(h, x):
        gi = jnp.dot(x, w_ih, precision=hp) + b_ih
        gh = jnp.dot(h, w_hh, precision=hp) + b_hh
        r = jax.nn.sigmoid(gi[:, :H] + gh[:, :H])
        z = jax.nn.sigmoid(gi[:, H:2 * H] + gh[:, H:2 * H])
        n = jnp.tanh(gi[:, 2 * H:] + r * gh[:, 2 * H:])
        h_new = (1.0 - z) * n + z * h
        return h_new, h_new

    h_last, ys = jax.lax.scan(step, h0[0], x_emb)
    return ys, h_last[None]


if __name__ == "__main__":
    vocab_size = 16
    hidden_size = 32
    seq_len = 8
    batch = 2

    key = jax.random.PRNGKey(0)
    k_model, k_x = jax.random.split(key)

    X = jax.random.randint(k_x, (seq_len, batch), 0, vocab_size, dtype=jnp.int32)

    # Perf path: bf16 gate stream + bf16 resident W_hh (f32 accumulation / gating).
    enc = EncoderRNNPallas(vocab_size, hidden_size, k_model)
    hidden0 = enc.init_hidden(batch)
    output, h_n = enc(X, hidden0)
    output = jax.block_until_ready(output)
    h_n = jax.block_until_ready(h_n)

    assert output.shape == (seq_len, batch, hidden_size)
    assert h_n.shape == (1, batch, hidden_size)

    # f32 HIGHEST-precision reference.
    emb = jnp.take(enc.embedding, X, axis=0)
    out_ref, h_ref = _gru_reference(emb, enc.w_ih, enc.w_hh, enc.b_ih, enc.b_hh, hidden0)

    # bf16 gate/weight storage => loosened tolerance (review correctness note).
    assert jnp.allclose(output, out_ref, atol=5e-2), "bf16-path output mismatch"
    assert jnp.allclose(h_n, h_ref, atol=5e-2), "bf16-path hidden mismatch"

    # Tight semantic check of the same kernel with an f32 stream dtype.
    enc_f32 = EncoderRNNPallas(vocab_size, hidden_size, k_model, stream_dtype=jnp.float32)
    out32, h32 = enc_f32(X, hidden0)
    out32 = jax.block_until_ready(out32)
    h32 = jax.block_until_ready(h32)
    assert jnp.allclose(out32, out_ref, atol=1e-4), "f32-path output mismatch"
    assert jnp.allclose(h32, h_ref, atol=1e-4), "f32-path hidden mismatch"

    print("KERNEL_OK")
</pallas_src>

<mosaic_0001>
module attributes {stable_mosaic.version = 11 : i64} {
  func.func @_probe_kernel(%arg0: i32, %arg1: memref<8x128xf32, #tpu.memory_space<vmem>>, %arg2: memref<8x128xf32, #tpu.memory_space<vmem>>) attributes {dimension_semantics = [#tpu.dimension_semantics<arbitrary>], iteration_bounds = array<i64: 2>, scalar_prefetch = 0 : i64, scratch_operands = 0 : i64, tpu.core_type = #tpu.core_type<tc>, window_params = [{pipeline_mode = #tpu.pipeline_mode<synchronous>, transform_indices = @transform_0, window_bounds = array<i64: 8, 128>}, {pipeline_mode = #tpu.pipeline_mode<synchronous>, transform_indices = @transform_1, window_bounds = array<i64: 8, 128>}]} {
    %c0 = arith.constant 0 : index
    %c0_0 = arith.constant 0 : index
    %0 = vector.load %arg1[%c0, %c0_0] : memref<8x128xf32, #tpu.memory_space<vmem>>, vector<8x128xf32>
    %c0_1 = arith.constant 0 : index
    %c0_2 = arith.constant 0 : index
    %1 = vector.load %arg2[%c0_1, %c0_2] : memref<8x128xf32, #tpu.memory_space<vmem>>, vector<8x128xf32>
    tpu.vector_store %arg2[%c0_1, %c0_2], %0 {strides = array<i32>} : memref<8x128xf32, #tpu.memory_space<vmem>>, vector<8x128xf32>,
    return
  }
  func.func @transform_0(%arg0: i32) -> (i32, i32) {
    %c0_i32 = arith.constant 0 : i32
    %c0_i32_0 = arith.constant 0 : i32
    %c0_i32_1 = arith.constant 0 : i32
    return %c0_i32, %c0_i32_0 : i32, i32
  }
  func.func @transform_1(%arg0: i32) -> (i32, i32) {
    %c0_i32 = arith.constant 0 : i32
    %c0_i32_0 = arith.constant 0 : i32
    %c0_i32_1 = arith.constant 0 : i32
    return %c0_i32, %c0_i32_0 : i32, i32
  }
}

module attributes {stable_mosaic.version = 11 : i64} {
  func.func @_gru_time_block_kernel(%arg0: i32, %arg1: i32, %arg2: memref<8x2x384xbf16, #tpu.memory_space<vmem>>, %arg3: memref<128x384xbf16, #tpu.memory_space<vmem>>, %arg4: memref<1x128xf32, #tpu.memory_space<vmem>>, %arg5: memref<1x2x128xf32, #tpu.memory_space<vmem>>, %arg6: memref<8x2x128xf32, #tpu.memory_space<vmem>>, %arg7: memref<1x2x128xf32, #tpu.memory_space<vmem>>, %arg8: memref<2x128xf32, #tpu.memory_space<vmem>>) attributes {dimension_semantics = [#tpu.dimension_semantics<parallel>, #tpu.dimension_semantics<arbitrary>], iteration_bounds = array<i64: 1, 1>, scalar_prefetch = 0 : i64, scratch_operands = 1 : i64, tpu.core_type = #tpu.core_type<tc>, window_params = [{transform_indices = @transform_0, window_bounds = array<i64: 8, 2, 384>}, {pipeline_mode = #tpu.pipeline_mode<synchronous>, transform_indices = @transform_1, window_bounds = array<i64: 128, 384>}, {pipeline_mode = #tpu.pipeline_mode<synchronous>, transform_indices = @transform_2, window_bounds = array<i64: 1, 128>}, {transform_indices = @transform_3, window_bounds = array<i64: 1, 2, 128>}, {transform_indices = @transform_4, window_bounds = array<i64: 8, 2, 128>}, {transform_indices = @transform_5, window_bounds = array<i64: 1, 2, 128>}]} {
    %c0_i32 = arith.constant 0 : i32
    %0 = arith.cmpi eq, %arg1, %c0_i32 : i32
    %1 = arith.extui %0 : i1 to i32
    %c0_i32_0 = arith.constant 0 : i32
    %2 = arith.cmpi ne, %1, %c0_i32_0 : i32
    scf.if %2 {
      %c0_106 = arith.constant 0 : index
      %c0_107 = arith.constant 0 : index
      %c0_108 = arith.constant 0 : index
      %346 = vector.load %arg5[%c0_106, %c0_107, %c0_108] : memref<1x2x128xf32, #tpu.memory_space<vmem>>, vector<1x2x128xf32>
      %347 = vector.shape_cast %346 : vector<1x2x128xf32> to vector<2x128xf32>
      %c0_109 = arith.constant 0 : index
      %c0_110 = arith.constant 0 : index
      %348 = vector.load %arg8[%c0_109, %c0_110] : memref<2x128xf32, #tpu.memory_space<vmem>>, vector<2x128xf32>
      tpu.vector_store %arg8[%c0_109, %c0_110], %347 {strides = array<i32>} : memref<2x128xf32, #tpu.memory_space<vmem>>, vector<2x128xf32>,
    } else {
    }
    %c0 = arith.constant 0 : index
    %c0_1 = arith.constant 0 : index
    %3 = vector.load %arg3[%c0, %c0_1] : memref<128x384xbf16, #tpu.memory_space<vmem>>, vector<128x384xbf16>
    %c0_2 = arith.constant 0 : index
    %c0_3 = arith.constant 0 : index
    %4 = vector.load %arg4[%c0_2, %c0_3] : memref<1x128xf32, #tpu.memory_space<vmem>>, vector<1x128xf32>
    %c0_4 = arith.constant 0 : index
    %c0_5 = arith.constant 0 : index
    %5 = vector.load %arg8[%c0_4, %c0_5] : memref<2x128xf32, #tpu.memory_space<vmem>>, vector<2x128xf32>
    %c0_i32_6 = arith.constant 0 : i32
    %6 = arith.index_cast %c0_i32_6 : i32 to index
    %c0_7 = arith.constant 0 : index
    %c0_8 = arith.constant 0 : index
    %7 = vector.load %arg2[%6, %c0_7, %c0_8] : memref<8x2x384xbf16, #tpu.memory_space<vmem>>, vector<1x2x384xbf16>
    %8 = vector.shape_cast %7 : vector<1x2x384xbf16> to vector<2x384xbf16>
    %9 = arith.extf %8 : vector<2x384xbf16> to vector<2x384xf32>
    %10 = arith.truncf %5 : vector<2x128xf32> to vector<2x128xbf16>
    %cst = arith.constant dense<0.000000e+00> : vector<2x384xf32>
    %11 = tpu.matmul %10, %3, %cst {dimension_numbers = #tpu.dot_dimension_numbers<[1], [0], [0], [1], [0, 0, 1, 1], [], []>} : vector<2x128xbf16>, vector<128x384xbf16>, vector<2x384xf32> -> vector<2x384xf32>
    %12 = vector.extract_strided_slice %9 {offsets = [0, 0], sizes = [2, 128], strides = [1, 1]} : vector<2x384xf32> to vector<2x128xf32>
    %13 = vector.extract_strided_slice %11 {offsets = [0, 0], sizes = [2, 128], strides = [1, 1]} : vector<2x384xf32> to vector<2x128xf32>
    %14 = arith.addf %12, %13 : vector<2x128xf32>
    %cst_9 = arith.constant 5.000000e-01 : f32
    %15 = vector.broadcast %cst_9 : f32 to vector<2x128xf32>
    %16 = arith.mulf %15, %14 : vector<2x128xf32>
    %17 = math.tanh %16 : vector<2x128xf32>
    %cst_10 = arith.constant 1.000000e+00 : f32
    %18 = vector.broadcast %cst_10 : f32 to vector<2x128xf32>
    %19 = arith.addf %17, %18 : vector<2x128xf32>
    %cst_11 = arith.constant 5.000000e-01 : f32
    %20 = vector.broadcast %cst_11 : f32 to vector<2x128xf32>
    %21 = arith.mulf %20, %19 : vector<2x128xf32>
    %22 = vector.extract_strided_slice %9 {offsets = [0, 128], sizes = [2, 128], strides = [1, 1]} : vector<2x384xf32> to vector<2x128xf32>
    %23 = vector.extract_strided_slice %11 {offsets = [0, 128], sizes = [2, 128], strides = [1, 1]} : vector<2x384xf32> to vector<2x128xf32>
    %24 = arith.addf %22, %23 : vector<2x128xf32>
    %cst_12 = arith.constant 5.000000e-01 : f32
    %25 = vector.broadcast %cst_12 : f32 to vector<2x128xf32>
    %26 = arith.mulf %25, %24 : vector<2x128xf32>
    %27 = math.tanh %26 : vector<2x128xf32>
    %cst_13 = arith.constant 1.000000e+00 : f32
    %28 = vector.broadcast %cst_13 : f32 to vector<2x128xf32>
    %29 = arith.addf %27, %28 : vector<2x128xf32>
    %cst_14 = arith.constant 5.000000e-01 : f32
    %30 = vector.broadcast %cst_14 : f32 to vector<2x128xf32>
    %31 = arith.mulf %30, %29 : vector<2x128xf32>
    %32 = vector.extract_strided_slice %9 {offsets = [0, 256], sizes = [2, 128], strides = [1, 1]} : vector<2x384xf32> to vector<2x128xf32>
    %33 = vector.extract_strided_slice %11 {offsets = [0, 256], sizes = [2, 128], strides = [1, 1]} : vector<2x384xf32> to vector<2x128xf32>
    %34 = vector.broadcast %4 : vector<1x128xf32> to vector<2x128xf32>
    %35 = arith.addf %33, %34 : vector<2x128xf32>
    %36 = arith.mulf %21, %35 : vector<2x128xf32>
    %37 = arith.addf %32, %36 : vector<2x128xf32>
    %38 = math.tanh %37 : vector<2x128xf32>
    %cst_15 = arith.constant 1.000000e+00 : f32
    %39 = vector.broadcast %cst_15 : f32 to vector<2x128xf32>
    %40 = arith.subf %39, %31 : vector<2x128xf32>
    %41 = arith.mulf %40, %38 : vector<2x128xf32>
    %42 = arith.mulf %31, %5 : vector<2x128xf32>
    %43 = arith.addf %41, %42 : vector<2x128xf32>
    %44 = arith.index_cast %c0_i32_6 : i32 to index
    %c0_16 = arith.constant 0 : index
    %c0_17 = arith.constant 0 : index
    %45 = vector.load %arg6[%44, %c0_16, %c0_17] : memref<8x2x128xf32, #tpu.memory_space<vmem>>, vector<1x2x128xf32>
    %46 = vector.shape_cast %45 : vector<1x2x128xf32> to vector<2x128xf32>
    %47 = vector.shape_cast %43 : vector<2x128xf32> to vector<1x2x128xf32>
    tpu.vector_store %arg6[%44, %c0_16, %c0_17], %47 {strides = array<i32>} : memref<8x2x128xf32, #tpu.memory_space<vmem>>, vector<1x2x128xf32>,
    %c1_i32 = arith.constant 1 : i32
    %48 = arith.index_cast %c1_i32 : i32 to index
    %c0_18 = arith.constant 0 : index
    %c0_19 = arith.constant 0 : index
    %49 = vector.load %arg2[%48, %c0_18, %c0_19] : memref<8x2x384xbf16, #tpu.memory_space<vmem>>, vector<1x2x384xbf16>
    %50 = vector.shape_cast %49 : vector<1x2x384xbf16> to vector<2x384xbf16>
    %51 = arith.extf %50 : vector<2x384xbf16> to vector<2x384xf32>
    %52 = arith.truncf %43 : vector<2x128xf32> to vector<2x128xbf16>
    %cst_20 = arith.constant dense<0.000000e+00> : vector<2x384xf32>
    %53 = tpu.matmul %52, %3, %cst_20 {dimension_numbers = #tpu.dot_dimension_numbers<[1], [0], [0], [1], [0, 0, 1, 1], [], []>} : vector<2x128xbf16>, vector<128x384xbf16>, vector<2x384xf32> -> vector<2x384xf32>
    %54 = vector.extract_strided_slice %51 {offsets = [0, 0], sizes = [2, 128], strides = [1, 1]} : vector<2x384xf32> to vector<2x128xf32>
    %55 = vector.extract_strided_slice %53 {offsets = [0, 0], sizes = [2, 128], strides = [1, 1]} : vector<2x384xf32> to vector<2x128xf32>
    %56 = arith.addf %54, %55 : vector<2x128xf32>
    %cst_21 = arith.constant 5.000000e-01 : f32
    %57 = vector.broadcast %cst_21 : f32 to vector<2x128xf32>
    %58 = arith.mulf %57, %56 : vector<2x128xf32>
    %59 = math.tanh %58 : vector<2x128xf32>
    %cst_22 = arith.constant 1.000000e+00 : f32
    %60 = vector.broadcast %cst_22 : f32 to vector<2x128xf32>
    %61 = arith.addf %59, %60 : vector<2x128xf32>
    %cst_23 = arith.constant 5.000000e-01 : f32
    %62 = vector.broadcast %cst_23 : f32 to vector<2x128xf32>
    %63 = arith.mulf %62, %61 : vector<2x128xf32>
    %64 = vector.extract_strided_slice %51 {offsets = [0, 128], sizes = [2, 128], strides = [1, 1]} : vector<2x384xf32> to vector<2x128xf32>
    %65 = vector.extract_strided_slice %53 {offsets = [0, 128], sizes = [2, 128], strides = [1, 1]} : vector<2x384xf32> to vector<2x128xf32>
    %66 = arith.addf %64, %65 : vector<2x128xf32>
    %cst_24 = arith.constant 5.000000e-01 : f32
    %67 = vector.broadcast %cst_24 : f32 to vector<2x128xf32>
    %68 = arith.mulf %67, %66 : vector<2x128xf32>
    %69 = math.tanh %68 : vector<2x128xf32>
    %cst_25 = arith.constant 1.000000e+00 : f32
    %70 = vector.broadcast %cst_25 : f32 to vector<2x128xf32>
    %71 = arith.addf %69, %70 : vector<2x128xf32>
    %cst_26 = arith.constant 5.000000e-01 : f32
    %72 = vector.broadcast %cst_26 : f32 to vector<2x128xf32>
    %73 = arith.mulf %72, %71 : vector<2x128xf32>
    %74 = vector.extract_strided_slice %51 {offsets = [0, 256], sizes = [2, 128], strides = [1, 1]} : vector<2x384xf32> to vector<2x128xf32>
    %75 = vector.extract_strided_slice %53 {offsets = [0, 256], sizes = [2, 128], strides = [1, 1]} : vector<2x384xf32> to vector<2x128xf32>
    %76 = vector.broadcast %4 : vector<1x128xf32> to vector<2x128xf32>
    %77 = arith.addf %75, %76 : vector<2x128xf32>
    %78 = arith.mulf %63, %77 : vector<2x128xf32>
    %79 = arith.addf %74, %78 : vector<2x128xf32>
    %80 = math.tanh %79 : vector<2x128xf32>
    %cst_27 = arith.constant 1.000000e+00 : f32
    %81 = vector.broadcast %cst_27 : f32 to vector<2x128xf32>
    %82 = arith.subf %81, %73 : vector<2x128xf32>
    %83 = arith.mulf %82, %80 : vector<2x128xf32>
    %84 = arith.mulf %73, %43 : vector<2x128xf32>
    %85 = arith.addf %83, %84 : vector<2x128xf32>
    %86 = arith.index_cast %c1_i32 : i32 to index
    %c0_28 = arith.constant 0 : index
    %c0_29 = arith.constant 0 : index
    %87 = vector.load %arg6[%86, %c0_28, %c0_29] : memref<8x2x128xf32, #tpu.memory_space<vmem>>, vector<1x2x128xf32>
    %88 = vector.shape_cast %87 : vector<1x2x128xf32> to vector<2x128xf32>
    %89 = vector.shape_cast %85 : vector<2x128xf32> to vector<1x2x128xf32>
    tpu.vector_store %arg6[%86, %c0_28, %c0_29], %89 {strides = array<i32>} : memref<8x2x128xf32, #tpu.memory_space<vmem>>, vector<1x2x128xf32>,
    %c2_i32 = arith.constant 2 : i32
    %90 = arith.index_cast %c2_i32 : i32 to index
    %c0_30 = arith.constant 0 : index
    %c0_31 = arith.constant 0 : index
    %91 = vector.load %arg2[%90, %c0_30, %c0_31] : memref<8x2x384xbf16, #tpu.memory_space<vmem>>, vector<1x2x384xbf16>
    %92 = vector.shape_cast %91 : vector<1x2x384xbf16> to vector<2x384xbf16>
    %93 = arith.extf %92 : vector<2x384xbf16> to vector<2x384xf32>
    %94 = arith.truncf %85 : vector<2x128xf32> to vector<2x128xbf16>
    %cst_32 = arith.constant dense<0.000000e+00> : vector<2x384xf32>
    %95 = tpu.matmul %94, %3, %cst_32 {dimension_numbers = #tpu.dot_dimension_numbers<[1], [0], [0], [1], [0, 0, 1, 1], [], []>} : vector<2x128xbf16>, vector<128x384xbf16>, vector<2x384xf32> -> vector<2x384xf32>
    %96 = vector.extract_strided_slice %93 {offsets = [0, 0], sizes = [2, 128], strides = [1, 1]} : vector<2x384xf32> to vector<2x128xf32>
    %97 = vector.extract_strided_slice %95 {offsets = [0, 0], sizes = [2, 128], strides = [1, 1]} : vector<2x384xf32> to vector<2x128xf32>
    %98 = arith.addf %96, %97 : vector<2x128xf32>
    %cst_33 = arith.constant 5.000000e-01 : f32
    %99 = vector.broadcast %cst_33 : f32 to vector<2x128xf32>
    %100 = arith.mulf %99, %98 : vector<2x128xf32>
    %101 = math.tanh %100 : vector<2x128xf32>
    %cst_34 = arith.constant 1.000000e+00 : f32
    %102 = vector.broadcast %cst_34 : f32 to vector<2x128xf32>
    %103 = arith.addf %101, %102 : vector<2x128xf32>
    %cst_35 = arith.constant 5.000000e-01 : f32
    %104 = vector.broadcast %cst_35 : f32 to vector<2x128xf32>
    %105 = arith.mulf %104, %103 : vector<2x128xf32>
    %106 = vector.extract_strided_slice %93 {offsets = [0, 128], sizes = [2, 128], strides = [1, 1]} : vector<2x384xf32> to vector<2x128xf32>
    %107 = vector.extract_strided_slice %95 {offsets = [0, 128], sizes = [2, 128], strides = [1, 1]} : vector<2x384xf32> to vector<2x128xf32>
    %108 = arith.addf %106, %107 : vector<2x128xf32>
    %cst_36 = arith.constant 5.000000e-01 : f32
    %109 = vector.broadcast %cst_36 : f32 to vector<2x128xf32>
    %110 = arith.mulf %109, %108 : vector<2x128xf32>
    %111 = math.tanh %110 : vector<2x128xf32>
    %cst_37 = arith.constant 1.000000e+00 : f32
    %112 = vector.broadcast %cst_37 : f32 to vector<2x128xf32>
    %113 = arith.addf %111, %112 : vector<2x128xf32>
    %cst_38 = arith.constant 5.000000e-01 : f32
    %114 = vector.broadcast %cst_38 : f32 to vector<2x128xf32>
    %115 = arith.mulf %114, %113 : vector<2x128xf32>
    %116 = vector.extract_strided_slice %93 {offsets = [0, 256], sizes = [2, 128], strides = [1, 1]} : vector<2x384xf32> to vector<2x128xf32>
    %117 = vector.extract_strided_slice %95 {offsets = [0, 256], sizes = [2, 128], strides = [1, 1]} : vector<2x384xf32> to vector<2x128xf32>
    %118 = vector.broadcast %4 : vector<1x128xf32> to vector<2x128xf32>
    %119 = arith.addf %117, %118 : vector<2x128xf32>
    %120 = arith.mulf %105, %119 : vector<2x128xf32>
    %121 = arith.addf %116, %120 : vector<2x128xf32>
    %122 = math.tanh %121 : vector<2x128xf32>
    %cst_39 = arith.constant 1.000000e+00 : f32
    %123 = vector.broadcast %cst_39 : f32 to vector<2x128xf32>
    %124 = arith.subf %123, %115 : vector<2x128xf32>
    %125 = arith.mulf %124, %122 : vector<2x128xf32>
    %126 = arith.mulf %115, %85 : vector<2x128xf32>
    %127 = arith.addf %125, %126 : vector<2x128xf32>
    %128 = arith.index_cast %c2_i32 : i32 to index
    %c0_40 = arith.constant 0 : index
    %c0_41 = arith.constant 0 : index
    %129 = vector.load %arg6[%128, %c0_40, %c0_41] : memref<8x2x128xf32, #tpu.memory_space<vmem>>, vector<1x2x128xf32>
    %130 = vector.shape_cast %129 : vector<1x2x128xf32> to vector<2x128xf32>
    %131 = vector.shape_cast %127 : vector<2x128xf32> to vector<1x2x128xf32>
    tpu.vector_store %arg6[%128, %c0_40, %c0_41], %131 {strides = array<i32>} : memref<8x2x128xf32, #tpu.memory_space<vmem>>, vector<1x2x128xf32>,
    %c3_i32 = arith.constant 3 : i32
    %132 = arith.index_cast %c3_i32 : i32 to index
    %c0_42 = arith.constant 0 : index
    %c0_43 = arith.constant 0 : index
    %133 = vector.load %arg2[%132, %c0_42, %c0_43] : memref<8x2x384xbf16, #tpu.memory_space<vmem>>, vector<1x2x384xbf16>
    %134 = vector.shape_cast %133 : vector<1x2x384xbf16> to vector<2x384xbf16>
    %135 = arith.extf %134 : vector<2x384xbf16> to vector<2x384xf32>
    %136 = arith.truncf %127 : vector<2x128xf32> to vector<2x128xbf16>
    %cst_44 = arith.constant dense<0.000000e+00> : vector<2x384xf32>
    %137 = tpu.matmul %136, %3, %cst_44 {dimension_numbers = #tpu.dot_dimension_numbers<[1], [0], [0], [1], [0, 0, 1, 1], [], []>} : vector<2x128xbf16>, vector<128x384xbf16>, vector<2x384xf32> -> vector<2x384xf32>
    %138 = vector.extract_strided_slice %135 {offsets = [0, 0], sizes = [2, 128], strides = [1, 1]} : vector<2x384xf32> to vector<2x128xf32>
    %139 = vector.extract_strided_slice %137 {offsets = [0, 0], sizes = [2, 128], strides = [1, 1]} : vector<2x384xf32> to vector<2x128xf32>
    %140 = arith.addf %138, %139 : vector<2x128xf32>
    %cst_45 = arith.constant 5.000000e-01 : f32
    %141 = vector.broadcast %cst_45 : f32 to vector<2x128xf32>
    %142 = arith.mulf %141, %140 : vector<2x128xf32>
    %143 = math.tanh %142 : vector<2x128xf32>
    %cst_46 = arith.constant 1.000000e+00 : f32
    %144 = vector.broadcast %cst_46 : f32 to vector<2x128xf32>
    %145 = arith.addf %143, %144 : vector<2x128xf32>
    %cst_47 = arith.constant 5.000000e-01 : f32
    %146 = vector.broadcast %cst_47 : f32 to vector<2x128xf32>
    %147 = arith.mulf %146, %145 : vector<2x128xf32>
    %148 = vector.extract_strided_slice %135 {offsets = [0, 128], sizes = [2, 128], strides = [1, 1]} : vector<2x384xf32> to vector<2x128xf32>
    %149 = vector.extract_strided_slice %137 {offsets = [0, 128], sizes = [2, 128], strides = [1, 1]} : vector<2x384xf32> to vector<2x128xf32>
    %150 = arith.addf %148, %149 : vector<2x128xf32>
    %cst_48 = arith.constant 5.000000e-01 : f32
    %151 = vector.broadcast %cst_48 : f32 to vector<2x128xf32>
    %152 = arith.mulf %151, %150 : vector<2x128xf32>
    %153 = math.tanh %152 : vector<2x128xf32>
    %cst_49 = arith.constant 1.000000e+00 : f32
    %154 = vector.broadcast %cst_49 : f32 to vector<2x128xf32>
    %155 = arith.addf %153, %154 : vector<2x128xf32>
    %cst_50 = arith.constant 5.000000e-01 : f32
    %156 = vector.broadcast %cst_50 : f32 to vector<2x128xf32>
    %157 = arith.mulf %156, %155 : vector<2x128xf32>
    %158 = vector.extract_strided_slice %135 {offsets = [0, 256], sizes = [2, 128], strides = [1, 1]} : vector<2x384xf32> to vector<2x128xf32>
    %159 = vector.extract_strided_slice %137 {offsets = [0, 256], sizes = [2, 128], strides = [1, 1]} : vector<2x384xf32> to vector<2x128xf32>
    %160 = vector.broadcast %4 : vector<1x128xf32> to vector<2x128xf32>
    %161 = arith.addf %159, %160 : vector<2x128xf32>
    %162 = arith.mulf %147, %161 : vector<2x128xf32>
    %163 = arith.addf %158, %162 : vector<2x128xf32>
    %164 = math.tanh %163 : vector<2x128xf32>
    %cst_51 = arith.constant 1.000000e+00 : f32
    %165 = vector.broadcast %cst_51 : f32 to vector<2x128xf32>
    %166 = arith.subf %165, %157 : vector<2x128xf32>
    %167 = arith.mulf %166, %164 : vector<2x128xf32>
    %168 = arith.mulf %157, %127 : vector<2x128xf32>
    %169 = arith.addf %167, %168 : vector<2x128xf32>
    %170 = arith.index_cast %c3_i32 : i32 to index
    %c0_52 = arith.constant 0 : index
    %c0_53 = arith.constant 0 : index
    %171 = vector.load %arg6[%170, %c0_52, %c0_53] : memref<8x2x128xf32, #tpu.memory_space<vmem>>, vector<1x2x128xf32>
    %172 = vector.shape_cast %171 : vector<1x2x128xf32> to vector<2x128xf32>
    %173 = vector.shape_cast %169 : vector<2x128xf32> to vector<1x2x128xf32>
    tpu.vector_store %arg6[%170, %c0_52, %c0_53], %173 {strides = array<i32>} : memref<8x2x128xf32, #tpu.memory_space<vmem>>, vector<1x2x128xf32>,
    %c4_i32 = arith.constant 4 : i32
    %174 = arith.index_cast %c4_i32 : i32 to index
    %c0_54 = arith.constant 0 : index
    %c0_55 = arith.constant 0 : index
    %175 = vector.load %arg2[%174, %c0_54, %c0_55] : memref<8x2x384xbf16, #tpu.memory_space<vmem>>, vector<1x2x384xbf16>
    %176 = vector.shape_cast %175 : vector<1x2x384xbf16> to vector<2x384xbf16>
    %177 = arith.extf %176 : vector<2x384xbf16> to vector<2x384xf32>
    %178 = arith.truncf %169 : vector<2x128xf32> to vector<2x128xbf16>
    %cst_56 = arith.constant dense<0.000000e+00> : vector<2x384xf32>
    %179 = tpu.matmul %178, %3, %cst_56 {dimension_numbers = #tpu.dot_dimension_numbers<[1], [0], [0], [1], [0, 0, 1, 1], [], []>} : vector<2x128xbf16>, vector<128x384xbf16>, vector<2x384xf32> -> vector<2x384xf32>
    %180 = vector.extract_strided_slice %177 {offsets = [0, 0], sizes = [2, 128], strides = [1, 1]} : vector<2x384xf32> to vector<2x128xf32>
    %181 = vector.extract_strided_slice %179 {offsets = [0, 0], sizes = [2, 128], strides = [1, 1]} : vector<2x384xf32> to vector<2x128xf32>
    %182 = arith.addf %180, %181 : vector<2x128xf32>
    %cst_57 = arith.constant 5.000000e-01 : f32
    %183 = vector.broadcast %cst_57 : f32 to vector<2x128xf32>
    %184 = arith.mulf %183, %182 : vector<2x128xf32>
    %185 = math.tanh %184 : vector<2x128xf32>
    %cst_58 = arith.constant 1.000000e+00 : f32
    %186 = vector.broadcast %cst_58 : f32 to vector<2x128xf32>
    %187 = arith.addf %185, %186 : vector<2x128xf32>
    %cst_59 = arith.constant 5.000000e-01 : f32
    %188 = vector.broadcast %cst_59 : f32 to vector<2x128xf32>
    %189 = arith.mulf %188, %187 : vector<2x128xf32>
    %190 = vector.extract_strided_slice %177 {offsets = [0, 128], sizes = [2, 128], strides = [1, 1]} : vector<2x384xf32> to vector<2x128xf32>
    %191 = vector.extract_strided_slice %179 {offsets = [0, 128], sizes = [2, 128], strides = [1, 1]} : vector<2x384xf32> to vector<2x128xf32>
    %192 = arith.addf %190, %191 : vector<2x128xf32>
    %cst_60 = arith.constant 5.000000e-01 : f32
    %193 = vector.broadcast %cst_60 : f32 to vector<2x128xf32>
    %194 = arith.mulf %193, %192 : vector<2x128xf32>
    %195 = math.tanh %194 : vector<2x128xf32>
    %cst_61 = arith.constant 1.000000e+00 : f32
    %196 = vector.broadcast %cst_61 : f32 to vector<2x128xf32>
    %197 = arith.addf %195, %196 : vector<2x128xf32>
    %cst_62 = arith.constant 5.000000e-01 : f32
    %198 = vector.broadcast %cst_62 : f32 to vector<2x128xf32>
    %199 = arith.mulf %198, %197 : vector<2x128xf32>
    %200 = vector.extract_strided_slice %177 {offsets = [0, 256], sizes = [2, 128], strides = [1, 1]} : vector<2x384xf32> to vector<2x128xf32>
    %201 = vector.extract_strided_slice %179 {offsets = [0, 256], sizes = [2, 128], strides = [1, 1]} : vector<2x384xf32> to vector<2x128xf32>
    %202 = vector.broadcast %4 : vector<1x128xf32> to vector<2x128xf32>
    %203 = arith.addf %201, %202 : vector<2x128xf32>
    %204 = arith.mulf %189, %203 : vector<2x128xf32>
    %205 = arith.addf %200, %204 : vector<2x128xf32>
    %206 = math.tanh %205 : vector<2x128xf32>
    %cst_63 = arith.constant 1.000000e+00 : f32
    %207 = vector.broadcast %cst_63 : f32 to vector<2x128xf32>
    %208 = arith.subf %207, %199 : vector<2x128xf32>
    %209 = arith.mulf %208, %206 : vector<2x128xf32>
    %210 = arith.mulf %199, %169 : vector<2x128xf32>
    %211 = arith.addf %209, %210 : vector<2x128xf32>
    %212 = arith.index_cast %c4_i32 : i32 to index
    %c0_64 = arith.constant 0 : index
    %c0_65 = arith.constant 0 : index
    %213 = vector.load %arg6[%212, %c0_64, %c0_65] : memref<8x2x128xf32, #tpu.memory_space<vmem>>, vector<1x2x128xf32>
    %214 = vector.shape_cast %213 : vector<1x2x128xf32> to vector<2x128xf32>
    %215 = vector.shape_cast %211 : vector<2x128xf32> to vector<1x2x128xf32>
    tpu.vector_store %arg6[%212, %c0_64, %c0_65], %215 {strides = array<i32>} : memref<8x2x128xf32, #tpu.memory_space<vmem>>, vector<1x2x128xf32>,
    %c5_i32 = arith.constant 5 : i32
    %216 = arith.index_cast %c5_i32 : i32 to index
    %c0_66 = arith.constant 0 : index
    %c0_67 = arith.constant 0 : index
    %217 = vector.load %arg2[%216, %c0_66, %c0_67] : memref<8x2x384xbf16, #tpu.memory_space<vmem>>, vector<1x2x384xbf16>
    %218 = vector.shape_cast %217 : vector<1x2x384xbf16> to vector<2x384xbf16>
    %219 = arith.extf %218 : vector<2x384xbf16> to vector<2x384xf32>
    %220 = arith.truncf %211 : vector<2x128xf32> to vector<2x128xbf16>
    %cst_68 = arith.constant dense<0.000000e+00> : vector<2x384xf32>
    %221 = tpu.matmul %220, %3, %cst_68 {dimension_numbers = #tpu.dot_dimension_numbers<[1], [0], [0], [1], [0, 0, 1, 1], [], []>} : vector<2x128xbf16>, vector<128x384xbf16>, vector<2x384xf32> -> vector<2x384xf32>
    %222 = vector.extract_strided_slice %219 {offsets = [0, 0], sizes = [2, 128], strides = [1, 1]} : vector<2x384xf32> to vector<2x128xf32>
    %223 = vector.extract_strided_slice %221 {offsets = [0, 0], sizes = [2, 128], strides = [1, 1]} : vector<2x384xf32> to vector<2x128xf32>
    %224 = arith.addf %222, %223 : vector<2x128xf32>
    %cst_69 = arith.constant 5.000000e-01 : f32
    %225 = vector.broadcast %cst_69 : f32 to vector<2x128xf32>
    %226 = arith.mulf %225, %224 : vector<2x128xf32>
    %227 = math.tanh %226 : vector<2x128xf32>
    %cst_70 = arith.constant 1.000000e+00 : f32
    %228 = vector.broadcast %cst_70 : f32 to vector<2x128xf32>
    %229 = arith.addf %227, %228 : vector<2x128xf32>
    %cst_71 = arith.constant 5.000000e-01 : f32
    %230 = vector.broadcast %cst_71 : f32 to vector<2x128xf32>
    %231 = arith.mulf %230, %229 : vector<2x128xf32>
    %232 = vector.extract_strided_slice %219 {offsets = [0, 128], sizes = [2, 128], strides = [1, 1]} : vector<2x384xf32> to vector<2x128xf32>
    %233 = vector.extract_strided_slice %221 {offsets = [0, 128], sizes = [2, 128], strides = [1, 1]} : vector<2x384xf32> to vector<2x128xf32>
    %234 = arith.addf %232, %233 : vector<2x128xf32>
    %cst_72 = arith.constant 5.000000e-01 : f32
    %235 = vector.broadcast %cst_72 : f32 to vector<2x128xf32>
    %236 = arith.mulf %235, %234 : vector<2x128xf32>
    %237 = math.tanh %236 : vector<2x128xf32>
    %cst_73 = arith.constant 1.000000e+00 : f32
    %238 = vector.broadcast %cst_73 : f32 to vector<2x128xf32>
    %239 = arith.addf %237, %238 : vector<2x128xf32>
    %cst_74 = arith.constant 5.000000e-01 : f32
    %240 = vector.broadcast %cst_74 : f32 to vector<2x128xf32>
    %241 = arith.mulf %240, %239 : vector<2x128xf32>
    %242 = vector.extract_strided_slice %219 {offsets = [0, 256], sizes = [2, 128], strides = [1, 1]} : vector<2x384xf32> to vector<2x128xf32>
    %243 = vector.extract_strided_slice %221 {offsets = [0, 256], sizes = [2, 128], strides = [1, 1]} : vector<2x384xf32> to vector<2x128xf32>
    %244 = vector.broadcast %4 : vector<1x128xf32> to vector<2x128xf32>
    %245 = arith.addf %243, %244 : vector<2x128xf32>
    %246 = arith.mulf %231, %245 : vector<2x128xf32>
    %247 = arith.addf %242, %246 : vector<2x128xf32>
    %248 = math.tanh %247 : vector<2x128xf32>
    %cst_75 = arith.constant 1.000000e+00 : f32
    %249 = vector.broadcast %cst_75 : f32 to vector<2x128xf32>
    %250 = arith.subf %249, %241 : vector<2x128xf32>
    %251 = arith.mulf %250, %248 : vector<2x128xf32>
    %252 = arith.mulf %241, %211 : vector<2x128xf32>
    %253 = arith.addf %251, %252 : vector<2x128xf32>
    %254 = arith.index_cast %c5_i32 : i32 to index
    %c0_76 = arith.constant 0 : index
    %c0_77 = arith.constant 0 : index
    %255 = vector.load %arg6[%254, %c0_76, %c0_77] : memref<8x2x128xf32, #tpu.memory_space<vmem>>, vector<1x2x128xf32>
    %256 = vector.shape_cast %255 : vector<1x2x128xf32> to vector<2x128xf32>
    %257 = vector.shape_cast %253 : vector<2x128xf32> to vector<1x2x128xf32>
    tpu.vector_store %arg6[%254, %c0_76, %c0_77], %257 {strides = array<i32>} : memref<8x2x128xf32, #tpu.memory_space<vmem>>, vector<1x2x128xf32>,
    %c6_i32 = arith.constant 6 : i32
    %258 = arith.index_cast %c6_i32 : i32 to index
    %c0_78 = arith.constant 0 : index
    %c0_79 = arith.constant 0 : index
    %259 = vector.load %arg2[%258, %c0_78, %c0_79] : memref<8x2x384xbf16, #tpu.memory_space<vmem>>, vector<1x2x384xbf16>
    %260 = vector.shape_cast %259 : vector<1x2x384xbf16> to vector<2x384xbf16>
    %261 = arith.extf %260 : vector<2x384xbf16> to vector<2x384xf32>
    %262 = arith.truncf %253 : vector<2x128xf32> to vector<2x128xbf16>
    %cst_80 = arith.constant dense<0.000000e+00> : vector<2x384xf32>
    %263 = tpu.matmul %262, %3, %cst_80 {dimension_numbers = #tpu.dot_dimension_numbers<[1], [0], [0], [1], [0, 0, 1, 1], [], []>} : vector<2x128xbf16>, vector<128x384xbf16>, vector<2x384xf32> -> vector<2x384xf32>
    %264 = vector.extract_strided_slice %261 {offsets = [0, 0], sizes = [2, 128], strides = [1, 1]} : vector<2x384xf32> to vector<2x128xf32>
    %265 = vector.extract_strided_slice %263 {offsets = [0, 0], sizes = [2, 128], strides = [1, 1]} : vector<2x384xf32> to vector<2x128xf32>
    %266 = arith.addf %264, %265 : vector<2x128xf32>
    %cst_81 = arith.constant 5.000000e-01 : f32
    %267 = vector.broadcast %cst_81 : f32 to vector<2x128xf32>
    %268 = arith.mulf %267, %266 : vector<2x128xf32>
    %269 = math.tanh %268 : vector<2x128xf32>
    %cst_82 = arith.constant 1.000000e+00 : f32
    %270 = vector.broadcast %cst_82 : f32 to vector<2x128xf32>
    %271 = arith.addf %269, %270 : vector<2x128xf32>
    %cst_83 = arith.constant 5.000000e-01 : f32
    %272 = vector.broadcast %cst_83 : f32 to vector<2x128xf32>
    %273 = arith.mulf %272, %271 : vector<2x128xf32>
    %274 = vector.extract_strided_slice %261 {offsets = [0, 128], sizes = [2, 128], strides = [1, 1]} : vector<2x384xf32> to vector<2x128xf32>
    %275 = vector.extract_strided_slice %263 {offsets = [0, 128], sizes = [2, 128], strides = [1, 1]} : vector<2x384xf32> to vector<2x128xf32>
    %276 = arith.addf %274, %275 : vector<2x128xf32>
    %cst_84 = arith.constant 5.000000e-01 : f32
    %277 = vector.broadcast %cst_84 : f32 to vector<2x128xf32>
    %278 = arith.mulf %277, %276 : vector<2x128xf32>
    %279 = math.tanh %278 : vector<2x128xf32>
    %cst_85 = arith.constant 1.000000e+00 : f32
    %280 = vector.broadcast %cst_85 : f32 to vector<2x128xf32>
    %281 = arith.addf %279, %280 : vector<2x128xf32>
    %cst_86 = arith.constant 5.000000e-01 : f32
    %282 = vector.broadcast %cst_86 : f32 to vector<2x128xf32>
    %283 = arith.mulf %282, %281 : vector<2x128xf32>
    %284 = vector.extract_strided_slice %261 {offsets = [0, 256], sizes = [2, 128], strides = [1, 1]} : vector<2x384xf32> to vector<2x128xf32>
    %285 = vector.extract_strided_slice %263 {offsets = [0, 256], sizes = [2, 128], strides = [1, 1]} : vector<2x384xf32> to vector<2x128xf32>
    %286 = vector.broadcast %4 : vector<1x128xf32> to vector<2x128xf32>
    %287 = arith.addf %285, %286 : vector<2x128xf32>
    %288 = arith.mulf %273, %287 : vector<2x128xf32>
    %289 = arith.addf %284, %288 : vector<2x128xf32>
    %290 = math.tanh %289 : vector<2x128xf32>
    %cst_87 = arith.constant 1.000000e+00 : f32
    %291 = vector.broadcast %cst_87 : f32 to vector<2x128xf32>
    %292 = arith.subf %291, %283 : vector<2x128xf32>
    %293 = arith.mulf %292, %290 : vector<2x128xf32>
    %294 = arith.mulf %283, %253 : vector<2x128xf32>
    %295 = arith.addf %293, %294 : vector<2x128xf32>
    %296 = arith.index_cast %c6_i32 : i32 to index
    %c0_88 = arith.constant 0 : index
    %c0_89 = arith.constant 0 : index
    %297 = vector.load %arg6[%296, %c0_88, %c0_89] : memref<8x2x128xf32, #tpu.memory_space<vmem>>, vector<1x2x128xf32>
    %298 = vector.shape_cast %297 : vector<1x2x128xf32> to vector<2x128xf32>
    %299 = vector.shape_cast %295 : vector<2x128xf32> to vector<1x2x128xf32>
    tpu.vector_store %arg6[%296, %c0_88, %c0_89], %299 {strides = array<i32>} : memref<8x2x128xf32, #tpu.memory_space<vmem>>, vector<1x2x128xf32>,
    %c7_i32 = arith.constant 7 : i32
    %300 = arith.index_cast %c7_i32 : i32 to index
    %c0_90 = arith.constant 0 : index
    %c0_91 = arith.constant 0 : index
    %301 = vector.load %arg2[%300, %c0_90, %c0_91] : memref<8x2x384xbf16, #tpu.memory_space<vmem>>, vector<1x2x384xbf16>
    %302 = vector.shape_cast %301 : vector<1x2x384xbf16> to vector<2x384xbf16>
    %303 = arith.extf %302 : vector<2x384xbf16> to vector<2x384xf32>
    %304 = arith.truncf %295 : vector<2x128xf32> to vector<2x128xbf16>
    %cst_92 = arith.constant dense<0.000000e+00> : vector<2x384xf32>
    %305 = tpu.matmul %304, %3, %cst_92 {dimension_numbers = #tpu.dot_dimension_numbers<[1], [0], [0], [1], [0, 0, 1, 1], [], []>} : vector<2x128xbf16>, vector<128x384xbf16>, vector<2x384xf32> -> vector<2x384xf32>
    %306 = vector.extract_strided_slice %303 {offsets = [0, 0], sizes = [2, 128], strides = [1, 1]} : vector<2x384xf32> to vector<2x128xf32>
    %307 = vector.extract_strided_slice %305 {offsets = [0, 0], sizes = [2, 128], strides = [1, 1]} : vector<2x384xf32> to vector<2x128xf32>
    %308 = arith.addf %306, %307 : vector<2x128xf32>
    %cst_93 = arith.constant 5.000000e-01 : f32
    %309 = vector.broadcast %cst_93 : f32 to vector<2x128xf32>
    %310 = arith.mulf %309, %308 : vector<2x128xf32>
    %311 = math.tanh %310 : vector<2x128xf32>
    %cst_94 = arith.constant 1.000000e+00 : f32
    %312 = vector.broadcast %cst_94 : f32 to vector<2x128xf32>
    %313 = arith.addf %311, %312 : vector<2x128xf32>
    %cst_95 = arith.constant 5.000000e-01 : f32
    %314 = vector.broadcast %cst_95 : f32 to vector<2x128xf32>
    %315 = arith.mulf %314, %313 : vector<2x128xf32>
    %316 = vector.extract_strided_slice %303 {offsets = [0, 128], sizes = [2, 128], strides = [1, 1]} : vector<2x384xf32> to vector<2x128xf32>
    %317 = vector.extract_strided_slice %305 {offsets = [0, 128], sizes = [2, 128], strides = [1, 1]} : vector<2x384xf32> to vector<2x128xf32>
    %318 = arith.addf %316, %317 : vector<2x128xf32>
    %cst_96 = arith.constant 5.000000e-01 : f32
    %319 = vector.broadcast %cst_96 : f32 to vector<2x128xf32>
    %320 = arith.mulf %319, %318 : vector<2x128xf32>
    %321 = math.tanh %320 : vector<2x128xf32>
    %cst_97 = arith.constant 1.000000e+00 : f32
    %322 = vector.broadcast %cst_97 : f32 to vector<2x128xf32>
    %323 = arith.addf %321, %322 : vector<2x128xf32>
    %cst_98 = arith.constant 5.000000e-01 : f32
    %324 = vector.broadcast %cst_98 : f32 to vector<2x128xf32>
    %325 = arith.mulf %324, %323 : vector<2x128xf32>
    %326 = vector.extract_strided_slice %303 {offsets = [0, 256], sizes = [2, 128], strides = [1, 1]} : vector<2x384xf32> to vector<2x128xf32>
    %327 = vector.extract_strided_slice %305 {offsets = [0, 256], sizes = [2, 128], strides = [1, 1]} : vector<2x384xf32> to vector<2x128xf32>
    %328 = vector.broadcast %4 : vector<1x128xf32> to vector<2x128xf32>
    %329 = arith.addf %327, %328 : vector<2x128xf32>
    %330 = arith.mulf %315, %329 : vector<2x128xf32>
    %331 = arith.addf %326, %330 : vector<2x128xf32>
    %332 = math.tanh %331 : vector<2x128xf32>
    %cst_99 = arith.constant 1.000000e+00 : f32
    %333 = vector.broadcast %cst_99 : f32 to vector<2x128xf32>
    %334 = arith.subf %333, %325 : vector<2x128xf32>
    %335 = arith.mulf %334, %332 : vector<2x128xf32>
    %336 = arith.mulf %325, %295 : vector<2x128xf32>
    %337 = arith.addf %335, %336 : vector<2x128xf32>
    %338 = arith.index_cast %c7_i32 : i32 to index
    %c0_100 = arith.constant 0 : index
    %c0_101 = arith.constant 0 : index
    %339 = vector.load %arg6[%338, %c0_100, %c0_101] : memref<8x2x128xf32, #tpu.memory_space<vmem>>, vector<1x2x128xf32>
    %340 = vector.shape_cast %339 : vector<1x2x128xf32> to vector<2x128xf32>
    %341 = vector.shape_cast %337 : vector<2x128xf32> to vector<1x2x128xf32>
    tpu.vector_store %arg6[%338, %c0_100, %c0_101], %341 {strides = array<i32>} : memref<8x2x128xf32, #tpu.memory_space<vmem>>, vector<1x2x128xf32>,
    %c8_i32 = arith.constant 8 : i32
    %c0_102 = arith.constant 0 : index
    %c0_103 = arith.constant 0 : index
    %342 = vector.load %arg8[%c0_102, %c0_103] : memref<2x128xf32, #tpu.memory_space<vmem>>, vector<2x128xf32>
    tpu.vector_store %arg8[%c0_102, %c0_103], %337 {strides = array<i32>} : memref<2x128xf32, #tpu.memory_space<vmem>>, vector<2x128xf32>,
    %c0_i32_104 = arith.constant 0 : i32
    %343 = arith.cmpi eq, %arg1, %c0_i32_104 : i32
    %344 = arith.extui %343 : i1 to i32
    %c0_i32_105 = arith.constant 0 : i32
    %345 = arith.cmpi ne, %344, %c0_i32_105 : i32
    scf.if %345 {
      %c0_106 = arith.constant 0 : index
      %c0_107 = arith.constant 0 : index
      %c0_108 = arith.constant 0 : index
      %346 = vector.load %arg7[%c0_106, %c0_107, %c0_108] : memref<1x2x128xf32, #tpu.memory_space<vmem>>, vector<1x2x128xf32>
      %347 = vector.shape_cast %346 : vector<1x2x128xf32> to vector<2x128xf32>
      %348 = vector.shape_cast %337 : vector<2x128xf32> to vector<1x2x128xf32>
      tpu.vector_store %arg7[%c0_106, %c0_107, %c0_108], %348 {strides = array<i32>} : memref<1x2x128xf32, #tpu.memory_space<vmem>>, vector<1x2x128xf32>,
    } else {
    }
    return
  }
  func.func @transform_0(%arg0: i32, %arg1: i32) -> (i32, i32, i32) {
    %c0_i32 = arith.constant 0 : i32
    %c0_i32_0 = arith.constant 0 : i32
    return %arg1, %arg0, %c0_i32 : i32, i32, i32
  }
  func.func @transform_1(%arg0: i32, %arg1: i32) -> (i32, i32) {
    %c0_i32 = arith.constant 0 : i32
    %c0_i32_0 = arith.constant 0 : i32
    %c0_i32_1 = arith.constant 0 : i32
    return %c0_i32, %c0_i32_0 : i32, i32
  }
  func.func @transform_2(%arg0: i32, %arg1: i32) -> (i32, i32) {
    %c0_i32 = arith.constant 0 : i32
    %c0_i32_0 = arith.constant 0 : i32
    %c0_i32_1 = arith.constant 0 : i32
    return %c0_i32, %c0_i32_0 : i32, i32
  }
  func.func @transform_3(%arg0: i32, %arg1: i32) -> (i32, i32, i32) {
    %c0_i32 = arith.constant 0 : i32
    %c0_i32_0 = arith.constant 0 : i32
    %c0_i32_1 = arith.constant 0 : i32
    return %c0_i32, %arg0, %c0_i32_0 : i32, i32, i32
  }
  func.func @transform_4(%arg0: i32, %arg1: i32) -> (i32, i32, i32) {
    %c0_i32 = arith.constant 0 : i32
    %c0_i32_0 = arith.constant 0 : i32
    return %arg1, %arg0, %c0_i32 : i32, i32, i32
  }
  func.func @transform_5(%arg0: i32, %arg1: i32) -> (i32, i32, i32) {
    %c0_i32 = arith.constant 0 : i32
    %c0_i32_0 = arith.constant 0 : i32
    %c0_i32_1 = arith.constant 0 : i32
    return %c0_i32, %arg0, %c0_i32_0 : i32, i32, i32
  }
}

</mosaic_0001>

<llo_original>
// kernel: tpu_custom_call.1
$region0: #{tpu_custom_call.1}
  #allocation0 [shape = 'u32[]', space=smem, size = 0x4, offset = 0x4, fixed_abs, tag = 'smem constant byte address 0x4 - core index']
  #allocation1 [shape = 'u32[144,128]{1,0:T(1,128)}', space=vmem, size = 0x12000, scoped, tag = 'internal scratch']
  %s0 = inlined_call_operand.hbm [shape: f32[8,128], index: 0, kind: input, shape index: {}]
  %s1 = inlined_call_operand.hbm [shape: f32[8,128], index: 1, kind: output, shape index: {}]
  %s2 = sld [smem:[#allocation0]]
  $region41: #{tpu_custom_call.1} parent=0
    _
  %s4 = ssub.s32 1, %s2
  %s5 = scalar_select 0, %s4, %s2
  $region1: #{tpu_custom_call.1} parent=0
    #allocation2 [shape = 'u8[4096]{0}', space=vmem, size = 0x1000, scoped, tag = 'input window, operand 0, single buffered']
    #allocation3 [shape = 's32[2]{0}', space=sflag, size = 0x8, scoped, tag = 'scoped memory for tpu_custom_call.1']
    #allocation4 [shape = 's32[2]{0}', space=sflag, size = 0x8, scoped, tag = 'scoped memory for tpu_custom_call.1']
    #allocation5 [shape = 'u8[4096]{0}', space=vmem, size = 0x1000, scoped, tag = 'output window, operand 0, single buffered']
    %6 = vsyncpa [#allocation3], 0
    %7 = vsyncpa [#allocation4], 0
    loop: start=0, step=1, limit=4
    $region2: #{tpu_custom_call.1} parent=1 // loop_pre_header
      _
    $region3: #{tpu_custom_call.1} parent=1 // loop_header
      %s9 = sphi 0, %s13
      %p10 = scmp.ge.s32.totalorder %s9, 4
      %s17 = sphi 0, %s17
      %s19 = sphi 0, %s17
      %s20 = sphi 0, %s19
      %s34 = sphi 0, %s20
      %s38 = sphi 0, %s38
      %s40 = sphi 0, %s38
      %s41 = sphi 0, %s40
      %s55 = sphi 0, %s41
    $region4: #{tpu_custom_call.1} parent=1 // loop_header_branch
      %12 = sbr.rel (%p10) target = $region8
    $region5: #{tpu_custom_call.1} parent=1 // loop_body
      %s14 = ssub.s32 %s9, 1
      %s15 = ssub.s32 %s9, 2
      %s16 = sadd.s32 %s9, 1
      %s18 = sadd.s32 %s17, 1
      %p21 = scmp.eq.s32.totalorder %s9, 1
      %p22 = scmp.ne.s32.totalorder %s17, %s19
      %p23 = scmp.eq.s32.totalorder %s9, 0
      %p24 = por %p22, %p23
      %p25 = scmp.ne.s32.totalorder %s17, %s19
      %p26 = scmp.eq.s32.totalorder %s14, 1
      %p27 = por %p25, %p26
      %p28 = scmp.ne.s32.totalorder %s19, %s20
      %p29 = scmp.eq.s32.totalorder %s14, 0
      %p30 = por %p28, %p29
      %p31 = scmp.ne.s32.totalorder %s19, %s20
      %p32 = scmp.eq.s32.totalorder %s15, 1
      %p33 = por %p31, %p32
      %p35 = scmp.ne.s32.totalorder %s20, %s34
      %p36 = scmp.eq.s32.totalorder %s15, 0
      %p37 = por %p35, %p36
      %s39 = sadd.s32 %s38, 1
      %p42 = scmp.eq.s32.totalorder %s9, 1
      %p43 = scmp.ne.s32.totalorder %s38, %s40
      %p44 = scmp.eq.s32.totalorder %s9, 0
      %p45 = por %p43, %p44
      %p46 = scmp.ne.s32.totalorder %s38, %s40
      %p47 = scmp.eq.s32.totalorder %s14, 1
      %p48 = por %p46, %p47
      %p49 = scmp.ne.s32.totalorder %s40, %s41
      %p50 = scmp.eq.s32.totalorder %s14, 0
      %p51 = por %p49, %p50
      %p52 = scmp.ne.s32.totalorder %s40, %s41
      %p53 = scmp.eq.s32.totalorder %s15, 1
      %p54 = por %p52, %p53
      %p56 = scmp.ne.s32.totalorder %s41, %s55
      %p57 = scmp.eq.s32.totalorder %s15, 0
      %p58 = por %p56, %p57
      %p59 = scmp.le.s32.totalorder 1, %s9
      %p60 = scmp.lt.s32.totalorder %s9, 3
      %p61 = pnand %p59, %p60
      %p62 = pneg %p61
      // Predicated region
      $region9: #{tpu_custom_call.1} parent=5 // pred_check
        _
      $region10: #{tpu_custom_call.1} parent=5 // pred_check_branch
        %64 = sbr.rel (%p61) target = $region12
      $region11: #{tpu_custom_call.1} parent=5 // pred_region
        %s65 = ssub.s32 %s9, 1
        // Predicated region
        $region13: #{tpu_custom_call.1} parent=11 // pred_check
          %p66 = pneg %p30
        $region14: #{tpu_custom_call.1} parent=11 // pred_check_branch
          %68 = sbr.rel (%p66) target = $region16
        $region15: #{tpu_custom_call.1} parent=11 // pred_region
          %s70 = ssub.s32 128, 128
          %71 = vsyncadd [#allocation3], %s70
          %s73 = sshll.u32 [#allocation2], 4
          %s74 = int_to_ptr.vmem [resolvable:$true] %s73
          %76 = dma.hbm_to_vmem [thread:$0]  %s0, 128, %s74, [#allocation3]
        $region16: #{tpu_custom_call.1} parent=11 // pred_fallthru
          _
      $region12: #{tpu_custom_call.1} parent=5 // pred_fallthru
        _
      %p77 = scmp.lt.s32.totalorder %s9, 2
      // Predicated region
      $region17: #{tpu_custom_call.1} parent=5 // pred_check
        %p78 = pneg %p77
      $region18: #{tpu_custom_call.1} parent=5 // pred_check_branch
        %80 = sbr.rel (%p78) target = $region20
      $region19: #{tpu_custom_call.1} parent=5 // pred_region
        _
      $region20: #{tpu_custom_call.1} parent=5 // pred_fallthru
        _
      %p81 = scmp.le.s32.totalorder 1, %s9
      %p82 = scmp.lt.s32.totalorder %s9, 3
      %p83 = pnand %p81, %p82
      %p84 = pneg %p83
      // Predicated region
      $region21: #{tpu_custom_call.1} parent=5 // pred_check
        _
      $region22: #{tpu_custom_call.1} parent=5 // pred_check_branch
        %86 = sbr.rel (%p83) target = $region24
      $region23: #{tpu_custom_call.1} parent=5 // pred_region
        %s87 = ssub.s32 %s9, 1
        // Predicated region
        $region25: #{tpu_custom_call.1} parent=23 // pred_check
          %p88 = pneg %p30
        $region26: #{tpu_custom_call.1} parent=23 // pred_check_branch
          %90 = sbr.rel (%p88) target = $region28
        $region27: #{tpu_custom_call.1} parent=23 // pred_region
          %91 = dma.done [#allocation3], 128
        $region28: #{tpu_custom_call.1} parent=23 // pred_fallthru
          _
        %p92 = pneg %p30
        %p93 = pneg %p27
        %p94 = pneg %p51
        %p95 = pneg %p48
        %v96 = vld [vmem:[#allocation2] sm:$0xff]
        %97 = vst [vmem:[#allocation5] sm:$0xff] %v96
        // Predicated region
        $region29: #{tpu_custom_call.1} parent=23 // pred_check
          %p98 = pneg %p48
        $region30: #{tpu_custom_call.1} parent=23 // pred_check_branch
          %100 = sbr.rel (%p98) target = $region32
        $region31: #{tpu_custom_call.1} parent=23 // pred_region
          %s102 = ssub.s32 128, 128
          %103 = vsyncadd [#allocation4], %s102
          %s105 = sshll.u32 [#allocation5], 4
          %s106 = int_to_ptr.vmem [resolvable:$true] %s105
          %108 = dma.vmem_to_hbm [thread:$0]  %s106, 128, %s1, [#allocation4]
        $region32: #{tpu_custom_call.1} parent=23 // pred_fallthru
          _
        // Predicated region
        $region33: #{tpu_custom_call.1} parent=23 // pred_check
          %p109 = pneg %p48
        $region34: #{tpu_custom_call.1} parent=23 // pred_check_branch
          %111 = sbr.rel (%p109) target = $region36
        $region35: #{tpu_custom_call.1} parent=23 // pred_region
          %112 = dma.done [#allocation4], 128
        $region36: #{tpu_custom_call.1} parent=23 // pred_fallthru
          _
      $region24: #{tpu_custom_call.1} parent=5 // pred_fallthru
        _
      %p113 = scmp.le.s32.totalorder 2, %s9
      // Predicated region
      $region37: #{tpu_custom_call.1} parent=5 // pred_check
        %p114 = pneg %p113
      $region38: #{tpu_custom_call.1} parent=5 // pred_check_branch
        %116 = sbr.rel (%p114) target = $region40
      $region39: #{tpu_custom_call.1} parent=5 // pred_region
        %s117 = ssub.s32 %s9, 2
      $region40: #{tpu_custom_call.1} parent=5 // pred_fallthru
        _
    $region6: #{tpu_custom_call.1} parent=1 // loop_footer
      %s13 = sadd.s32 1, %s9
    $region7: #{tpu_custom_call.1} parent=1 // loop_footer_branch
      %8 = sbr.rel target = $region3
    $region8: #{tpu_custom_call.1} parent=1 // loop_exit
      _
    %118 = vsyncpa [#allocation3], 1
    %s119 = scalar_lea.sflag [#allocation3], 1
    %120 = vsyncpa %s119, 1
    %121 = vsyncpa [#allocation4], 1
    %s122 = scalar_lea.sflag [#allocation4], 1
    %123 = vsyncpa %s122, 1

// kernel: tpu_custom_call.1
$region0: #{tpu_custom_call.1}
  #allocation0 [shape = 'u32[]', space=smem, size = 0x4, offset = 0x4, fixed_abs, tag = 'smem constant byte address 0x4 - core index']
  #allocation1 [shape = 'u32[144,128]{1,0:T(1,128)}', space=vmem, size = 0x12000, scoped, tag = 'internal scratch']
  #allocation2 [shape = 'f32[2,128]{1,0:T(2,128)}', space=vmem, size = 0x400, scoped, tag = 'scratch operand']
  %s0 = inlined_call_operand.hbm [shape: bf16[8,2,384], index: 0, kind: input, shape index: {}]
  %s1 = inlined_call_operand.hbm [shape: bf16[128,384], index: 1, kind: input, shape index: {}]
  %s2 = inlined_call_operand.vmem [shape: f32[1,128], index: 2, kind: input, shape index: {}]
  %s3 = inlined_call_operand.vmem [shape: f32[1,2,128], index: 3, kind: input, shape index: {}]
  %s4 = inlined_call_operand.hbm [shape: f32[8,2,128], index: 4, kind: output, shape index: {0}]
  %s5 = inlined_call_operand.hbm [shape: f32[1,2,128], index: 5, kind: output, shape index: {1}]
  %6 = xla_tuple %s4, %s5
  %s7 = sld [smem:[#allocation0]]
  $region50: #{tpu_custom_call.1} parent=0
    _
  %s9 = ssub.s32 1, %s7
  %s10 = scalar_select 0, %s9, %s7
  $region1: #{tpu_custom_call.1} parent=0
    #allocation3 [shape = 'u8[12288]{0}', space=vmem, size = 0x3000, scoped, tag = 'input window, operand 0, single buffered']
    #allocation4 [shape = 's32[1]{0}', space=sflag, size = 0x4, scoped, tag = 'scoped memory for tpu_custom_call.1']
    #allocation5 [shape = 's32[1]{0}', space=sflag, size = 0x4, scoped, tag = 'scoped memory for tpu_custom_call.1']
    #allocation6 [shape = 'u8[98304]{0}', space=vmem, size = 0x18000, scoped, tag = 'input window, operand 1, single buffered']
    #allocation7 [shape = 's32[1]{0}', space=sflag, size = 0x4, scoped, tag = 'scoped memory for tpu_custom_call.1']
    #allocation8 [shape = 'u8[8192]{0}', space=vmem, size = 0x2000, scoped, tag = 'output window, operand 0, single buffered']
    #allocation9 [shape = 'u8[1024]{0}', space=vmem, size = 0x400, scoped, tag = 'output window, operand 1, single buffered']
    #allocation10 [shape = 's32[1]{0}', space=sflag, size = 0x4, scoped, tag = 'scoped memory for tpu_custom_call.1']
    %11 = vsyncpa [#allocation4], 0
    %12 = vsyncpa [#allocation7], 0
    %13 = vsyncpa [#allocation5], 0
    %14 = vsyncpa [#allocation10], 0
    // Predicated region
    $region2: #{tpu_custom_call.1} parent=1 // pred_check
      _
    $region3: #{tpu_custom_call.1} parent=1 // pred_check_branch
      %16 = sbr.rel (0) target = $region5
    $region4: #{tpu_custom_call.1} parent=1 // pred_region
      %s18 = ssub.s32 384, 384
      %19 = vsyncadd [#allocation4], %s18
      %s20 = sshll.u32 [#allocation3], 4
      %s21 = int_to_ptr.vmem [resolvable:$true] %s20
      %26 = dma.hbm_to_vmem [thread:$0]  %s0, 384, %s21, [#allocation4], 48, 48, 3
    $region5: #{tpu_custom_call.1} parent=1 // pred_fallthru
      _
    // Predicated region
    $region6: #{tpu_custom_call.1} parent=1 // pred_check
      _
    $region7: #{tpu_custom_call.1} parent=1 // pred_check_branch
      %28 = sbr.rel (0) target = $region9
    $region8: #{tpu_custom_call.1} parent=1 // pred_region
      %s30 = ssub.s32 3072, 3072
      %31 = vsyncadd [#allocation7], %s30
      %s32 = sshll.u32 [#allocation6], 4
      %s33 = int_to_ptr.vmem [resolvable:$true] %s32
      %38 = dma.hbm_to_vmem [thread:$0]  %s1, 3072, %s33, [#allocation7], 192, 192, 12
    $region9: #{tpu_custom_call.1} parent=1 // pred_fallthru
      _
    // Predicated region
    $region10: #{tpu_custom_call.1} parent=1 // pred_check
      _
    $region11: #{tpu_custom_call.1} parent=1 // pred_check_branch
      %40 = sbr.rel (0) target = $region13
    $region12: #{tpu_custom_call.1} parent=1 // pred_region
      _
    $region13: #{tpu_custom_call.1} parent=1 // pred_fallthru
      _
    // Predicated region
    $region14: #{tpu_custom_call.1} parent=1 // pred_check
      _
    $region15: #{tpu_custom_call.1} parent=1 // pred_check_branch
      %42 = sbr.rel (0) target = $region17
    $region16: #{tpu_custom_call.1} parent=1 // pred_region
      _
    $region17: #{tpu_custom_call.1} parent=1 // pred_fallthru
      _
    // Predicated region
    $region18: #{tpu_custom_call.1} parent=1 // pred_check
      _
    $region19: #{tpu_custom_call.1} parent=1 // pred_check_branch
      %44 = sbr.rel (0) target = $region21
    $region20: #{tpu_custom_call.1} parent=1 // pred_region
      %45 = dma.done [#allocation4], 384
    $region21: #{tpu_custom_call.1} parent=1 // pred_fallthru
      _
    // Predicated region
    $region22: #{tpu_custom_call.1} parent=1 // pred_check
      _
    $region23: #{tpu_custom_call.1} parent=1 // pred_check_branch
      %47 = sbr.rel (0) target = $region25
    $region24: #{tpu_custom_call.1} parent=1 // pred_region
      %48 = dma.done [#allocation7], 3072
    $region25: #{tpu_custom_call.1} parent=1 // pred_fallthru
      _
    %p50 = scmp.eq.s32.totalorder 0, 0
    // Predicated region
    $region26: #{tpu_custom_call.1} parent=1 // pred_check
      %p51 = pneg %p50
    $region27: #{tpu_custom_call.1} parent=1 // pred_check_branch
      %53 = sbr.rel (%p51) target = $region29
    $region28: #{tpu_custom_call.1} parent=1 // pred_region
      %v54 = vld [vmem:[%s3] sm:$0x3]
      %55 = vst [vmem:[#allocation2] sm:$0x3] %v54
    $region29: #{tpu_custom_call.1} parent=1 // pred_fallthru
      _
    %v56 = vld [vmem:[#allocation6] sm:$0xff]
    %v57 = vld [vmem:[#allocation6 + $0x8] sm:$0xf]
    %v58 = vld [vmem:[#allocation6 + $0xc] sm:$0xff]
    %v59 = vld [vmem:[#allocation6 + $0x14] sm:$0xf]
    %v60 = vld [vmem:[#allocation6 + $0x18] sm:$0xff]
    %v61 = vld [vmem:[#allocation6 + $0x20] sm:$0xf]
    %v62 = vld [vmem:[#allocation6 + $0x24] sm:$0xff]
    %v63 = vld [vmem:[#allocation6 + $0x2c] sm:$0xf]
    %v64 = vld [vmem:[#allocation6 + $0x30] sm:$0xff]
    %v65 = vld [vmem:[#allocation6 + $0x38] sm:$0xf]
    %v66 = vld [vmem:[#allocation6 + $0x3c] sm:$0xff]
    %v67 = vld [vmem:[#allocation6 + $0x44] sm:$0xf]
    %v68 = vld [vmem:[#allocation6 + $0x48] sm:$0xff]
    %v69 = vld [vmem:[#allocation6 + $0x50] sm:$0xf]
    %v70 = vld [vmem:[#allocation6 + $0x54] sm:$0xff]
    %v71 = vld [vmem:[#allocation6 + $0x5c] sm:$0xf]
    %v72 = vld [vmem:[#allocation6 + $0x60] sm:$0xff]
    %v73 = vld [vmem:[#allocation6 + $0x68] sm:$0xf]
    %v74 = vld [vmem:[#allocation6 + $0x6c] sm:$0xff]
    %v75 = vld [vmem:[#allocation6 + $0x74] sm:$0xf]
    %v76 = vld [vmem:[#allocation6 + $0x78] sm:$0xff]
    %v77 = vld [vmem:[#allocation6 + $0x80] sm:$0xf]
    %v78 = vld [vmem:[#allocation6 + $0x84] sm:$0xff]
    %v79 = vld [vmem:[#allocation6 + $0x8c] sm:$0xf]
    %v80 = vld [vmem:[#allocation6 + $0x90] sm:$0xff]
    %v81 = vld [vmem:[#allocation6 + $0x98] sm:$0xf]
    %v82 = vld [vmem:[#allocation6 + $0x9c] sm:$0xff]
    %v83 = vld [vmem:[#allocation6 + $0xa4] sm:$0xf]
    %v84 = vld [vmem:[#allocation6 + $0xa8] sm:$0xff]
    %v85 = vld [vmem:[#allocation6 + $0xb0] sm:$0xf]
    %v86 = vld [vmem:[#allocation6 + $0xb4] sm:$0xff]
    %v87 = vld [vmem:[#allocation6 + $0xbc] sm:$0xf]
    %v88 = vld [vmem:[%s2] sm:$0x1]
    %v89 = vld [vmem:[#allocation2] sm:$0x3]
    %v90 = vld [vmem:[#allocation3] sm:$0x7]
    %v91 = vunpack.c.l.bf16 %v90
    %v92 = vpack.c.bf16 %v89, %v89
    %v125 = vunpack.c.l.b16 %v56
    %v126 = vunpack.c.h.b16 %v56
    %v127 = vunpack.c.l.b16 %v57
    %v128 = vunpack.c.l.b16 %v58
    %v129 = vunpack.c.h.b16 %v58
    %v130 = vunpack.c.l.b16 %v59
    %v131 = vunpack.c.l.b16 %v60
    %v132 = vunpack.c.h.b16 %v60
    %v133 = vunpack.c.l.b16 %v61
    %v134 = vunpack.c.l.b16 %v62
    %v135 = vunpack.c.h.b16 %v62
    %v136 = vunpack.c.l.b16 %v63
    %v137 = vunpack.c.l.b16 %v64
    %v138 = vunpack.c.h.b16 %v64
    %v139 = vunpack.c.l.b16 %v65
    %v140 = vunpack.c.l.b16 %v66
    %v141 = vunpack.c.h.b16 %v66
    %v142 = vunpack.c.l.b16 %v67
    %v143 = vunpack.c.l.b16 %v68
    %v144 = vunpack.c.h.b16 %v68
    %v145 = vunpack.c.l.b16 %v69
    %v146 = vunpack.c.l.b16 %v70
    %v147 = vunpack.c.h.b16 %v70
    %v148 = vunpack.c.l.b16 %v71
    %v149 = vunpack.c.l.b16 %v72
    %v150 = vunpack.c.h.b16 %v72
    %v151 = vunpack.c.l.b16 %v73
    %v152 = vunpack.c.l.b16 %v74
    %v153 = vunpack.c.h.b16 %v74
    %v154 = vunpack.c.l.b16 %v75
    %v155 = vunpack.c.l.b16 %v76
    %v156 = vunpack.c.h.b16 %v76
    %v157 = vunpack.c.l.b16 %v77
    %v158 = vunpack.c.l.b16 %v78
    %v159 = vunpack.c.h.b16 %v78
    %v160 = vunpack.c.l.b16 %v79
    %v161 = vunpack.c.l.b16 %v80
    %v162 = vunpack.c.h.b16 %v80
    %v163 = vunpack.c.l.b16 %v81
    %v164 = vunpack.c.l.b16 %v82
    %v165 = vunpack.c.h.b16 %v82
    %v166 = vunpack.c.l.b16 %v83
    %v167 = vunpack.c.l.b16 %v84
    %v168 = vunpack.c.h.b16 %v84
    %v169 = vunpack.c.l.b16 %v85
    %v170 = vunpack.c.l.b16 %v86
    %v171 = vunpack.c.h.b16 %v86
    %v172 = vunpack.c.l.b16 %v87
    %v173 = vpack.c.b16 %v128, %v125
    %v174 = vpack.c.b16 %v129, %v126
    %v175 = vpack.c.b16 %v130, %v127
    %v176 = vpack.c.b16 %v134, %v131
    %v177 = vpack.c.b16 %v135, %v132
    %v178 = vpack.c.b16 %v136, %v133
    %v179 = vpack.c.b16 %v140, %v137
    %v180 = vpack.c.b16 %v141, %v138
    %v181 = vpack.c.b16 %v142, %v139
    %v182 = vpack.c.b16 %v146, %v143
    %v183 = vpack.c.b16 %v147, %v144
    %v184 = vpack.c.b16 %v148, %v145
    %v185 = vpack.c.b16 %v152, %v149
    %v186 = vpack.c.b16 %v153, %v150
    %v187 = vpack.c.b16 %v154, %v151
    %v188 = vpack.c.b16 %v158, %v155
    %v189 = vpack.c.b16 %v159, %v156
    %v190 = vpack.c.b16 %v160, %v157
    %v191 = vpack.c.b16 %v164, %v161
    %v192 = vpack.c.b16 %v165, %v162
    %v193 = vpack.c.b16 %v166, %v163
    %v194 = vpack.c.b16 %v170, %v167
    %v195 = vpack.c.b16 %v171, %v168
    %v196 = vpack.c.b16 %v172, %v169
    %221 = vmatprep.subr.bf16.mxu0 %v174
    %222 = vmatpush1.bf16.msra.mxu0 %v173
    %223 = vmatprep.subr.bf16.mxu0 %v177
    %224 = vmatpush1.bf16.msra.mxu0 %v176
    %225 = vmatprep.subr.bf16.mxu0 %v180
    %226 = vmatpush1.bf16.msra.mxu0 %v179
    %227 = vmatprep.subr.bf16.mxu0 %v183
    %228 = vmatpush1.bf16.msra.mxu0 %v182
    %229 = vmatprep.subr.bf16.mxu0 %v186
    %230 = vmatpush1.bf16.msra.mxu0 %v185
    %231 = vmatprep.subr.bf16.mxu0 %v189
    %232 = vmatpush1.bf16.msra.mxu0 %v188
    %233 = vmatprep.subr.bf16.mxu0 %v192
    %234 = vmatpush1.bf16.msra.mxu0 %v191
    %235 = vmatprep.subr.bf16.mxu0 %v195
    %236 = vmatpush1.bf16.msra.mxu0 %v194
    %237 = vmatprep.subr.bf16.mxu0 0
    %238 = vmatpush1.bf16.msra.mxu0 0
    %239 = vmatprep.subr.bf16.mxu0 0
    %240 = vmatpush1.bf16.msra.mxu0 0
    %241 = vmatprep.subr.bf16.mxu0 0
    %242 = vmatpush1.bf16.msra.mxu0 0
    %243 = vmatprep.subr.bf16.mxu0 0
    %244 = vmatpush1.bf16.msra.mxu0 0
    %245 = vmatprep.subr.bf16.mxu0 0
    %246 = vmatpush1.bf16.msra.mxu0 0
    %247 = vmatprep.subr.bf16.mxu0 0
    %248 = vmatpush1.bf16.msra.mxu0 0
    %249 = vmatprep.subr.bf16.mxu0 0
    %250 = vmatpush1.bf16.msra.mxu0 0
    %251 = vmatprep.subr.bf16.mxu0 0
    %252 = vmatpush1.bf16.msra.mxu0 0
    %253 = vmatprep.mubr.bf16.mxu0 0
    %254 = vmatmul.mubr.bf16.gmra.mrb[0].mxu0 %v92
    %v255 = vpop.f32.mrb[0].mxu0
    %v256 = vadd.f32 0.0, %v255
    %v257 = vpop.f32.mrb[0].mxu0
    %v258 = vadd.f32 0.0, %v257
    %v259 = vpop.f32.mrb[0].mxu0
    %v260 = vpop.f32.mrb[0].mxu0
    %261 = vdwg.mxu0
    %262 = vmatprep.subr.bf16.mxu0 0
    %263 = vmatpush1.bf16.msra.mxu0 %v175
    %264 = vmatprep.subr.bf16.mxu0 0
    %265 = vmatpush1.bf16.msra.mxu0 %v178
    %266 = vmatprep.subr.bf16.mxu0 0
    %267 = vmatpush1.bf16.msra.mxu0 %v181
    %268 = vmatprep.subr.bf16.mxu0 0
    %269 = vmatpush1.bf16.msra.mxu0 %v184
    %270 = vmatprep.subr.bf16.mxu0 0
    %271 = vmatpush1.bf16.msra.mxu0 %v187
    %272 = vmatprep.subr.bf16.mxu0 0
    %273 = vmatpush1.bf16.msra.mxu0 %v190
    %274 = vmatprep.subr.bf16.mxu0 0
    %275 = vmatpush1.bf16.msra.mxu0 %v193
    %276 = vmatprep.subr.bf16.mxu0 0
    %277 = vmatpush1.bf16.msra.mxu0 %v196
    %278 = vmatprep.subr.bf16.mxu0 0
    %279 = vmatpush1.bf16.msra.mxu0 0
    %280 = vmatprep.subr.bf16.mxu0 0
    %281 = vmatpush1.bf16.msra.mxu0 0
    %282 = vmatprep.subr.bf16.mxu0 0
    %283 = vmatpush1.bf16.msra.mxu0 0
    %284 = vmatprep.subr.bf16.mxu0 0
    %285 = vmatpush1.bf16.msra.mxu0 0
    %286 = vmatprep.subr.bf16.mxu0 0
    %287 = vmatpush1.bf16.msra.mxu0 0
    %288 = vmatprep.subr.bf16.mxu0 0
    %289 = vmatpush1.bf16.msra.mxu0 0
    %290 = vmatprep.subr.bf16.mxu0 0
    %291 = vmatpush1.bf16.msra.mxu0 0
    %292 = vmatprep.subr.bf16.mxu0 0
    %293 = vmatpush1.bf16.msra.mxu0 0
    %294 = vmatprep.mubr.bf16.mxu0 0
    %295 = vmatmul.mubr.bf16.gmra.mrb[0].mxu0 %v92
    %v296 = vpop.f32.mrb[0].mxu0
    %v297 = vadd.f32 0.0, %v296
    %v298 = vpop.f32.mrb[0].mxu0
    %v299 = vpop.f32.mrb[0].mxu0
    %v300 = vpop.f32.mrb[0].mxu0
    %301 = vdwg.mxu0
    %v302 = vadd.f32 %v91, %v256
    %v303 = vmul.f32 %v302, 0.5
    %v304 = vtanh.pop %v303
    %v305 = vadd.f32 %v304, 1.0
    %v306 = vmul.f32 %v305, 0.5
    %v308 = vrot.slane %v91, 2
    %v310 = vadd.f32 %v308, %v258
    %v311 = vmul.f32 %v310, 0.5
    %v312 = vtanh.pop %v311
    %v313 = vadd.f32 %v312, 1.0
    %v314 = vmul.f32 %v313, 0.5
    %v316 = vlaneseq
    %v317 = vshrl.u32 %v316, 7
    %v318 = vsub.s32 0, %v317
    %v319 = vrot.slane %v88, %v318
    %v321 = vadd.f32 %v297, %v319
    %v322 = vmul.f32 %v306, %v321
    %v323 = vrot.slane %v91, 4
    %v325 = vadd.f32 %v323, %v322
    %v326 = vtanh.pop %v325
    %v327 = vsub.f32 1.0, %v314
    %v328 = vmul.f32 %v327, %v326
    %v329 = vmul.f32 %v314, %v89
    %v330 = vadd.f32 %v328, %v329
    %331 = vst [vmem:[#allocation8] sm:$0x3] %v330
    %s332 = scalar_lea.vmem [#allocation3], 3
    %v333 = vld [vmem:[%s332] sm:$0x7]
    %v334 = vunpack.c.l.bf16 %v333
    %v335 = vpack.c.bf16 %v330, %v330
    %336 = vmatprep.subr.bf16.mxu0 %v174
    %337 = vmatpush1.bf16.msra.mxu0 %v173
    %338 = vmatprep.subr.bf16.mxu0 %v177
    %339 = vmatpush1.bf16.msra.mxu0 %v176
    %340 = vmatprep.subr.bf16.mxu0 %v180
    %341 = vmatpush1.bf16.msra.mxu0 %v179
    %342 = vmatprep.subr.bf16.mxu0 %v183
    %343 = vmatpush1.bf16.msra.mxu0 %v182
    %344 = vmatprep.subr.bf16.mxu0 %v186
    %345 = vmatpush1.bf16.msra.mxu0 %v185
    %346 = vmatprep.subr.bf16.mxu0 %v189
    %347 = vmatpush1.bf16.msra.mxu0 %v188
    %348 = vmatprep.subr.bf16.mxu0 %v192
    %349 = vmatpush1.bf16.msra.mxu0 %v191
    %350 = vmatprep.subr.bf16.mxu0 %v195
    %351 = vmatpush1.bf16.msra.mxu0 %v194
    %352 = vmatprep.subr.bf16.mxu0 0
    %353 = vmatpush1.bf16.msra.mxu0 0
    %354 = vmatprep.subr.bf16.mxu0 0
    %355 = vmatpush1.bf16.msra.mxu0 0
    %356 = vmatprep.subr.bf16.mxu0 0
    %357 = vmatpush1.bf16.msra.mxu0 0
    %358 = vmatprep.subr.bf16.mxu0 0
    %359 = vmatpush1.bf16.msra.mxu0 0
    %360 = vmatprep.subr.bf16.mxu0 0
    %361 = vmatpush1.bf16.msra.mxu0 0
    %362 = vmatprep.subr.bf16.mxu0 0
    %363 = vmatpush1.bf16.msra.mxu0 0
    %364 = vmatprep.subr.bf16.mxu0 0
    %365 = vmatpush1.bf16.msra.mxu0 0
    %366 = vmatprep.subr.bf16.mxu0 0
    %367 = vmatpush1.bf16.msra.mxu0 0
    %368 = vmatprep.mubr.bf16.mxu0 0
    %369 = vmatmul.mubr.bf16.gmra.mrb[0].mxu0 %v335
    %v370 = vpop.f32.mrb[0].mxu0
    %v371 = vadd.f32 0.0, %v370
    %v372 = vpop.f32.mrb[0].mxu0
    %v373 = vadd.f32 0.0, %v372
    %v374 = vpop.f32.mrb[0].mxu0
    %v375 = vpop.f32.mrb[0].mxu0
    %376 = vdwg.mxu0
    %377 = vmatprep.subr.bf16.mxu0 0
    %378 = vmatpush1.bf16.msra.mxu0 %v175
    %379 = vmatprep.subr.bf16.mxu0 0
    %380 = vmatpush1.bf16.msra.mxu0 %v178
    %381 = vmatprep.subr.bf16.mxu0 0
    %382 = vmatpush1.bf16.msra.mxu0 %v181
    %383 = vmatprep.subr.bf16.mxu0 0
    %384 = vmatpush1.bf16.msra.mxu0 %v184
    %385 = vmatprep.subr.bf16.mxu0 0
    %386 = vmatpush1.bf16.msra.mxu0 %v187
    %387 = vmatprep.subr.bf16.mxu0 0
    %388 = vmatpush1.bf16.msra.mxu0 %v190
    %389 = vmatprep.subr.bf16.mxu0 0
    %390 = vmatpush1.bf16.msra.mxu0 %v193
    %391 = vmatprep.subr.bf16.mxu0 0
    %392 = vmatpush1.bf16.msra.mxu0 %v196
    %393 = vmatprep.subr.bf16.mxu0 0
    %394 = vmatpush1.bf16.msra.mxu0 0
    %395 = vmatprep.subr.bf16.mxu0 0
    %396 = vmatpush1.bf16.msra.mxu0 0
    %397 = vmatprep.subr.bf16.mxu0 0
    %398 = vmatpush1.bf16.msra.mxu0 0
    %399 = vmatprep.subr.bf16.mxu0 0
    %400 = vmatpush1.bf16.msra.mxu0 0
    %401 = vmatprep.subr.bf16.mxu0 0
    %402 = vmatpush1.bf16.msra.mxu0 0
    %403 = vmatprep.subr.bf16.mxu0 0
    %404 = vmatpush1.bf16.msra.mxu0 0
    %405 = vmatprep.subr.bf16.mxu0 0
    %406 = vmatpush1.bf16.msra.mxu0 0
    %407 = vmatprep.subr.bf16.mxu0 0
    %408 = vmatpush1.bf16.msra.mxu0 0
    %409 = vmatprep.mubr.bf16.mxu0 0
    %410 = vmatmul.mubr.bf16.gmra.mrb[0].mxu0 %v335
    %v411 = vpop.f32.mrb[0].mxu0
    %v412 = vadd.f32 0.0, %v411
    %v413 = vpop.f32.mrb[0].mxu0
    %v414 = vpop.f32.mrb[0].mxu0
    %v415 = vpop.f32.mrb[0].mxu0
    %416 = vdwg.mxu0
    %v417 = vadd.f32 %v334, %v371
    %v418 = vmul.f32 %v417, 0.5
    %v419 = vtanh.pop %v418
    %v420 = vadd.f32 %v419, 1.0
    %v421 = vmul.f32 %v420, 0.5
    %v423 = vrot.slane %v334, 2
    %v425 = vadd.f32 %v423, %v373
    %v426 = vmul.f32 %v425, 0.5
    %v427 = vtanh.pop %v426
    %v428 = vadd.f32 %v427, 1.0
    %v429 = vmul.f32 %v428, 0.5
    %v430 = vadd.f32 %v412, %v319
    %v431 = vmul.f32 %v421, %v430
    %v432 = vrot.slane %v334, 4
    %v434 = vadd.f32 %v432, %v431
    %v435 = vtanh.pop %v434
    %v436 = vsub.f32 1.0, %v429
    %v437 = vmul.f32 %v436, %v435
    %v438 = vmul.f32 %v429, %v330
    %v439 = vadd.f32 %v437, %v438
    %s440 = scalar_lea.vmem [#allocation8], 2
    %441 = vst [vmem:[%s440] sm:$0x3] %v439
    %s442 = scalar_lea.vmem [#allocation3], 6
    %v443 = vld [vmem:[%s442] sm:$0x7]
    %v444 = vunpack.c.l.bf16 %v443
    %v445 = vpack.c.bf16 %v439, %v439
    %446 = vmatprep.subr.bf16.mxu0 %v174
    %447 = vmatpush1.bf16.msra.mxu0 %v173
    %448 = vmatprep.subr.bf16.mxu0 %v177
    %449 = vmatpush1.bf16.msra.mxu0 %v176
    %450 = vmatprep.subr.bf16.mxu0 %v180
    %451 = vmatpush1.bf16.msra.mxu0 %v179
    %452 = vmatprep.subr.bf16.mxu0 %v183
    %453 = vmatpush1.bf16.msra.mxu0 %v182
    %454 = vmatprep.subr.bf16.mxu0 %v186
    %455 = vmatpush1.bf16.msra.mxu0 %v185
    %456 = vmatprep.subr.bf16.mxu0 %v189
    %457 = vmatpush1.bf16.msra.mxu0 %v188
    %458 = vmatprep.subr.bf16.mxu0 %v192
    %459 = vmatpush1.bf16.msra.mxu0 %v191
    %460 = vmatprep.subr.bf16.mxu0 %v195
    %461 = vmatpush1.bf16.msra.mxu0 %v194
    %462 = vmatprep.subr.bf16.mxu0 0
    %463 = vmatpush1.bf16.msra.mxu0 0
    %464 = vmatprep.subr.bf16.mxu0 0
    %465 = vmatpush1.bf16.msra.mxu0 0
    %466 = vmatprep.subr.bf16.mxu0 0
    %467 = vmatpush1.bf16.msra.mxu0 0
    %468 = vmatprep.subr.bf16.mxu0 0
    %469 = vmatpush1.bf16.msra.mxu0 0
    %470 = vmatprep.subr.bf16.mxu0 0
    %471 = vmatpush1.bf16.msra.mxu0 0
    %472 = vmatprep.subr.bf16.mxu0 0
    %473 = vmatpush1.bf16.msra.mxu0 0
    %474 = vmatprep.subr.bf16.mxu0 0
    %475 = vmatpush1.bf16.msra.mxu0 0
    %476 = vmatprep.subr.bf16.mxu0 0
    %477 = vmatpush1.bf16.msra.mxu0 0
    %478 = vmatprep.mubr.bf16.mxu0 0
    %479 = vmatmul.mubr.bf16.gmra.mrb[0].mxu0 %v445
    %v480 = vpop.f32.mrb[0].mxu0
    %v481 = vadd.f32 0.0, %v480
    %v482 = vpop.f32.mrb[0].mxu0
    %v483 = vadd.f32 0.0, %v482
    %v484 = vpop.f32.mrb[0].mxu0
    %v485 = vpop.f32.mrb[0].mxu0
    %486 = vdwg.mxu0
    %487 = vmatprep.subr.bf16.mxu0 0
    %488 = vmatpush1.bf16.msra.mxu0 %v175
    %489 = vmatprep.subr.bf16.mxu0 0
    %490 = vmatpush1.bf16.msra.mxu0 %v178
    %491 = vmatprep.subr.bf16.mxu0 0
    %492 = vmatpush1.bf16.msra.mxu0 %v181
    %493 = vmatprep.subr.bf16.mxu0 0
    %494 = vmatpush1.bf16.msra.mxu0 %v184
    %495 = vmatprep.subr.bf16.mxu0 0
    %496 = vmatpush1.bf16.msra.mxu0 %v187
    %497 = vmatprep.subr.bf16.mxu0 0
    %498 = vmatpush1.bf16.msra.mxu0 %v190
    %499 = vmatprep.subr.bf16.mxu0 0
    %500 = vmatpush1.bf16.msra.mxu0 %v193
    %501 = vmatprep.subr.bf16.mxu0 0
    %502 = vmatpush1.bf16.msra.mxu0 %v196
    %503 = vmatprep.subr.bf16.mxu0 0
    %504 = vmatpush1.bf16.msra.mxu0 0
    %505 = vmatprep.subr.bf16.mxu0 0
    %506 = vmatpush1.bf16.msra.mxu0 0
    %507 = vmatprep.subr.bf16.mxu0 0
    %508 = vmatpush1.bf16.msra.mxu0 0
    %509 = vmatprep.subr.bf16.mxu0 0
    %510 = vmatpush1.bf16.msra.mxu0 0
    %511 = vmatprep.subr.bf16.mxu0 0
    %512 = vmatpush1.bf16.msra.mxu0 0
    %513 = vmatprep.subr.bf16.mxu0 0
    %514 = vmatpush1.bf16.msra.mxu0 0
    %515 = vmatprep.subr.bf16.mxu0 0
    %516 = vmatpush1.bf16.msra.mxu0 0
    %517 = vmatprep.subr.bf16.mxu0 0
    %518 = vmatpush1.bf16.msra.mxu0 0
    %519 = vmatprep.mubr.bf16.mxu0 0
    %520 = vmatmul.mubr.bf16.gmra.mrb[0].mxu0 %v445
    %v521 = vpop.f32.mrb[0].mxu0
    %v522 = vadd.f32 0.0, %v521
    %v523 = vpop.f32.mrb[0].mxu0
    %v524 = vpop.f32.mrb[0].mxu0
    %v525 = vpop.f32.mrb[0].mxu0
    %526 = vdwg.mxu0
    %v527 = vadd.f32 %v444, %v481
    %v528 = vmul.f32 %v527, 0.5
    %v529 = vtanh.pop %v528
    %v530 = vadd.f32 %v529, 1.0
    %v531 = vmul.f32 %v530, 0.5
    %v533 = vrot.slane %v444, 2
    %v535 = vadd.f32 %v533, %v483
    %v536 = vmul.f32 %v535, 0.5
    %v537 = vtanh.pop %v536
    %v538 = vadd.f32 %v537, 1.0
    %v539 = vmul.f32 %v538, 0.5
    %v540 = vadd.f32 %v522, %v319
    %v541 = vmul.f32 %v531, %v540
    %v542 = vrot.slane %v444, 4
    %v544 = vadd.f32 %v542, %v541
    %v545 = vtanh.pop %v544
    %v546 = vsub.f32 1.0, %v539
    %v547 = vmul.f32 %v546, %v545
    %v548 = vmul.f32 %v539, %v439
    %v549 = vadd.f32 %v547, %v548
    %s550 = scalar_lea.vmem [#allocation8], 4
    %551 = vst [vmem:[%s550] sm:$0x3] %v549
    %s552 = scalar_lea.vmem [#allocation3], 9
    %v553 = vld [vmem:[%s552] sm:$0x7]
    %v554 = vunpack.c.l.bf16 %v553
    %v555 = vpack.c.bf16 %v549, %v549
    %556 = vmatprep.subr.bf16.mxu0 %v174
    %557 = vmatpush1.bf16.msra.mxu0 %v173
    %558 = vmatprep.subr.bf16.mxu0 %v177
    %559 = vmatpush1.bf16.msra.mxu0 %v176
    %560 = vmatprep.subr.bf16.mxu0 %v180
    %561 = vmatpush1.bf16.msra.mxu0 %v179
    %562 = vmatprep.subr.bf16.mxu0 %v183
    %563 = vmatpush1.bf16.msra.mxu0 %v182
    %564 = vmatprep.subr.bf16.mxu0 %v186
    %565 = vmatpush1.bf16.msra.mxu0 %v185
    %566 = vmatprep.subr.bf16.mxu0 %v189
    %567 = vmatpush1.bf16.msra.mxu0 %v188
    %568 = vmatprep.subr.bf16.mxu0 %v192
    %569 = vmatpush1.bf16.msra.mxu0 %v191
    %570 = vmatprep.subr.bf16.mxu0 %v195
    %571 = vmatpush1.bf16.msra.mxu0 %v194
    %572 = vmatprep.subr.bf16.mxu0 0
    %573 = vmatpush1.bf16.msra.mxu0 0
    %574 = vmatprep.subr.bf16.mxu0 0
    %575 = vmatpush1.bf16.msra.mxu0 0
    %576 = vmatprep.subr.bf16.mxu0 0
    %577 = vmatpush1.bf16.msra.mxu0 0
    %578 = vmatprep.subr.bf16.mxu0 0
    %579 = vmatpush1.bf16.msra.mxu0 0
    %580 = vmatprep.subr.bf16.mxu0 0
    %581 = vmatpush1.bf16.msra.mxu0 0
    %582 = vmatprep.subr.bf16.mxu0 0
    %583 = vmatpush1.bf16.msra.mxu0 0
    %584 = vmatprep.subr.bf16.mxu0 0
    %585 = vmatpush1.bf16.msra.mxu0 0
    %586 = vmatprep.subr.bf16.mxu0 0
    %587 = vmatpush1.bf16.msra.mxu0 0
    %588 = vmatprep.mubr.bf16.mxu0 0
    %589 = vmatmul.mubr.bf16.gmra.mrb[0].mxu0 %v555
    %v590 = vpop.f32.mrb[0].mxu0
    %v591 = vadd.f32 0.0, %v590
    %v592 = vpop.f32.mrb[0].mxu0
    %v593 = vadd.f32 0.0, %v592
    %v594 = vpop.f32.mrb[0].mxu0
    %v595 = vpop.f32.mrb[0].mxu0
    %596 = vdwg.mxu0
    %597 = vmatprep.subr.bf16.mxu0 0
    %598 = vmatpush1.bf16.msra.mxu0 %v175
    %599 = vmatprep.subr.bf16.mxu0 0
    %600 = vmatpush1.bf16.msra.mxu0 %v178
    %601 = vmatprep.subr.bf16.mxu0 0
    %602 = vmatpush1.bf16.msra.mxu0 %v181
    %603 = vmatprep.subr.bf16.mxu0 0
    %604 = vmatpush1.bf16.msra.mxu0 %v184
    %605 = vmatprep.subr.bf16.mxu0 0
    %606 = vmatpush1.bf16.msra.mxu0 %v187
    %607 = vmatprep.subr.bf16.mxu0 0
    %608 = vmatpush1.bf16.msra.mxu0 %v190
    %609 = vmatprep.subr.bf16.mxu0 0
    %610 = vmatpush1.bf16.msra.mxu0 %v193
    %611 = vmatprep.subr.bf16.mxu0 0
    %612 = vmatpush1.bf16.msra.mxu0 %v196
    %613 = vmatprep.subr.bf16.mxu0 0
    %614 = vmatpush1.bf16.msra.mxu0 0
    %615 = vmatprep.subr.bf16.mxu0 0
    %616 = vmatpush1.bf16.msra.mxu0 0
    %617 = vmatprep.subr.bf16.mxu0 0
    %618 = vmatpush1.bf16.msra.mxu0 0
    %619 = vmatprep.subr.bf16.mxu0 0
    %620 = vmatpush1.bf16.msra.mxu0 0
    %621 = vmatprep.subr.bf16.mxu0 0
    %622 = vmatpush1.bf16.msra.mxu0 0
    %623 = vmatprep.subr.bf16.mxu0 0
    %624 = vmatpush1.bf16.msra.mxu0 0
    %625 = vmatprep.subr.bf16.mxu0 0
    %626 = vmatpush1.bf16.msra.mxu0 0
    %627 = vmatprep.subr.bf16.mxu0 0
    %628 = vmatpush1.bf16.msra.mxu0 0
    %629 = vmatprep.mubr.bf16.mxu0 0
    %630 = vmatmul.mubr.bf16.gmra.mrb[0].mxu0 %v555
    %v631 = vpop.f32.mrb[0].mxu0
    %v632 = vadd.f32 0.0, %v631
    %v633 = vpop.f32.mrb[0].mxu0
    %v634 = vpop.f32.mrb[0].mxu0
    %v635 = vpop.f32.mrb[0].mxu0
    %636 = vdwg.mxu0
    %v637 = vadd.f32 %v554, %v591
    %v638 = vmul.f32 %v637, 0.5
    %v639 = vtanh.pop %v638
    %v640 = vadd.f32 %v639, 1.0
    %v641 = vmul.f32 %v640, 0.5
    %v643 = vrot.slane %v554, 2
    %v645 = vadd.f32 %v643, %v593
    %v646 = vmul.f32 %v645, 0.5
    %v647 = vtanh.pop %v646
    %v648 = vadd.f32 %v647, 1.0
    %v649 = vmul.f32 %v648, 0.5
    %v650 = vadd.f32 %v632, %v319
    %v651 = vmul.f32 %v641, %v650
    %v652 = vrot.slane %v554, 4
    %v654 = vadd.f32 %v652, %v651
    %v655 = vtanh.pop %v654
    %v656 = vsub.f32 1.0, %v649
    %v657 = vmul.f32 %v656, %v655
    %v658 = vmul.f32 %v649, %v549
    %v659 = vadd.f32 %v657, %v658
    %s660 = scalar_lea.vmem [#allocation8], 6
    %661 = vst [vmem:[%s660] sm:$0x3] %v659
    %s662 = scalar_lea.vmem [#allocation3], 12
    %v663 = vld [vmem:[%s662] sm:$0x7]
    %v664 = vunpack.c.l.bf16 %v663
    %v665 = vpack.c.bf16 %v659, %v659
    %666 = vmatprep.subr.bf16.mxu0 %v174
    %667 = vmatpush1.bf16.msra.mxu0 %v173
    %668 = vmatprep.subr.bf16.mxu0 %v177
    %669 = vmatpush1.bf16.msra.mxu0 %v176
    %670 = vmatprep.subr.bf16.mxu0 %v180
    %671 = vmatpush1.bf16.msra.mxu0 %v179
    %672 = vmatprep.subr.bf16.mxu0 %v183
    %673 = vmatpush1.bf16.msra.mxu0 %v182
    %674 = vmatprep.subr.bf16.mxu0 %v186
    %675 = vmatpush1.bf16.msra.mxu0 %v185
    %676 = vmatprep.subr.bf16.mxu0 %v189
    %677 = vmatpush1.bf16.msra.mxu0 %v188
    %678 = vmatprep.subr.bf16.mxu0 %v192
    %679 = vmatpush1.bf16.msra.mxu0 %v191
    %680 = vmatprep.subr.bf16.mxu0 %v195
    %681 = vmatpush1.bf16.msra.mxu0 %v194
    %682 = vmatprep.subr.bf16.mxu0 0
    %683 = vmatpush1.bf16.msra.mxu0 0
    %684 = vmatprep.subr.bf16.mxu0 0
    %685 = vmatpush1.bf16.msra.mxu0 0
    %686 = vmatprep.subr.bf16.mxu0 0
    %687 = vmatpush1.bf16.msra.mxu0 0
    %688 = vmatprep.subr.bf16.mxu0 0
    %689 = vmatpush1.bf16.msra.mxu0 0
    %690 = vmatprep.subr.bf16.mxu0 0
    %691 = vmatpush1.bf16.msra.mxu0 0
    %692 = vmatprep.subr.bf16.mxu0 0
    %693 = vmatpush1.bf16.msra.mxu0 0
    %694 = vmatprep.subr.bf16.mxu0 0
    %695 = vmatpush1.bf16.msra.mxu0 0
    %696 = vmatprep.subr.bf16.mxu0 0
    %697 = vmatpush1.bf16.msra.mxu0 0
    %698 = vmatprep.mubr.bf16.mxu0 0
    %699 = vmatmul.mubr.bf16.gmra.mrb[0].mxu0 %v665
    %v700 = vpop.f32.mrb[0].mxu0
    %v701 = vadd.f32 0.0, %v700
    %v702 = vpop.f32.mrb[0].mxu0
    %v703 = vadd.f32 0.0, %v702
    %v704 = vpop.f32.mrb[0].mxu0
    %v705 = vpop.f32.mrb[0].mxu0
    %706 = vdwg.mxu0
    %707 = vmatprep.subr.bf16.mxu0 0
    %708 = vmatpush1.bf16.msra.mxu0 %v175
    %709 = vmatprep.subr.bf16.mxu0 0
    %710 = vmatpush1.bf16.msra.mxu0 %v178
    %711 = vmatprep.subr.bf16.mxu0 0
    %712 = vmatpush1.bf16.msra.mxu0 %v181
    %713 = vmatprep.subr.bf16.mxu0 0
    %714 = vmatpush1.bf16.msra.mxu0 %v184
    %715 = vmatprep.subr.bf16.mxu0 0
    %716 = vmatpush1.bf16.msra.mxu0 %v187
    %717 = vmatprep.subr.bf16.mxu0 0
    %718 = vmatpush1.bf16.msra.mxu0 %v190
    %719 = vmatprep.subr.bf16.mxu0 0
    %720 = vmatpush1.bf16.msra.mxu0 %v193
    %721 = vmatprep.subr.bf16.mxu0 0
    %722 = vmatpush1.bf16.msra.mxu0 %v196
    %723 = vmatprep.subr.bf16.mxu0 0
    %724 = vmatpush1.bf16.msra.mxu0 0
    %725 = vmatprep.subr.bf16.mxu0 0
    %726 = vmatpush1.bf16.msra.mxu0 0
    %727 = vmatprep.subr.bf16.mxu0 0
    %728 = vmatpush1.bf16.msra.mxu0 0
    %729 = vmatprep.subr.bf16.mxu0 0
    %730 = vmatpush1.bf16.msra.mxu0 0
    %731 = vmatprep.subr.bf16.mxu0 0
    %732 = vmatpush1.bf16.msra.mxu0 0
    %733 = vmatprep.subr.bf16.mxu0 0
    %734 = vmatpush1.bf16.msra.mxu0 0
    %735 = vmatprep.subr.bf16.mxu0 0
    %736 = vmatpush1.bf16.msra.mxu0 0
    %737 = vmatprep.subr.bf16.mxu0 0
    %738 = vmatpush1.bf16.msra.mxu0 0
    %739 = vmatprep.mubr.bf16.mxu0 0
    %740 = vmatmul.mubr.bf16.gmra.mrb[0].mxu0 %v665
    %v741 = vpop.f32.mrb[0].mxu0
    %v742 = vadd.f32 0.0, %v741
    %v743 = vpop.f32.mrb[0].mxu0
    %v744 = vpop.f32.mrb[0].mxu0
    %v745 = vpop.f32.mrb[0].mxu0
    %746 = vdwg.mxu0
    %v747 = vadd.f32 %v664, %v701
    %v748 = vmul.f32 %v747, 0.5
    %v749 = vtanh.pop %v748
    %v750 = vadd.f32 %v749, 1.0
    %v751 = vmul.f32 %v750, 0.5
    %v753 = vrot.slane %v664, 2
    %v755 = vadd.f32 %v753, %v703
    %v756 = vmul.f32 %v755, 0.5
    %v757 = vtanh.pop %v756
    %v758 = vadd.f32 %v757, 1.0
    %v759 = vmul.f32 %v758, 0.5
    %v760 = vadd.f32 %v742, %v319
    %v761 = vmul.f32 %v751, %v760
    %v762 = vrot.slane %v664, 4
    %v764 = vadd.f32 %v762, %v761
    %v765 = vtanh.pop %v764
    %v766 = vsub.f32 1.0, %v759
    %v767 = vmul.f32 %v766, %v765
    %v768 = vmul.f32 %v759, %v659
    %v769 = vadd.f32 %v767, %v768
    %s770 = scalar_lea.vmem [#allocation8], 8
    %771 = vst [vmem:[%s770] sm:$0x3] %v769
    %s772 = scalar_lea.vmem [#allocation3], 15
    %v773 = vld [vmem:[%s772] sm:$0x7]
    %v774 = vunpack.c.l.bf16 %v773
    %v775 = vpack.c.bf16 %v769, %v769
    %776 = vmatprep.subr.bf16.mxu0 %v174
    %777 = vmatpush1.bf16.msra.mxu0 %v173
    %778 = vmatprep.subr.bf16.mxu0 %v177
    %779 = vmatpush1.bf16.msra.mxu0 %v176
    %780 = vmatprep.subr.bf16.mxu0 %v180
    %781 = vmatpush1.bf16.msra.mxu0 %v179
    %782 = vmatprep.subr.bf16.mxu0 %v183
    %783 = vmatpush1.bf16.msra.mxu0 %v182
    %784 = vmatprep.subr.bf16.mxu0 %v186
    %785 = vmatpush1.bf16.msra.mxu0 %v185
    %786 = vmatprep.subr.bf16.mxu0 %v189
    %787 = vmatpush1.bf16.msra.mxu0 %v188
    %788 = vmatprep.subr.bf16.mxu0 %v192
    %789 = vmatpush1.bf16.msra.mxu0 %v191
    %790 = vmatprep.subr.bf16.mxu0 %v195
    %791 = vmatpush1.bf16.msra.mxu0 %v194
    %792 = vmatprep.subr.bf16.mxu0 0
    %793 = vmatpush1.bf16.msra.mxu0 0
    %794 = vmatprep.subr.bf16.mxu0 0
    %795 = vmatpush1.bf16.msra.mxu0 0
    %796 = vmatprep.subr.bf16.mxu0 0
    %797 = vmatpush1.bf16.msra.mxu0 0
    %798 = vmatprep.subr.bf16.mxu0 0
    %799 = vmatpush1.bf16.msra.mxu0 0
    %800 = vmatprep.subr.bf16.mxu0 0
    %801 = vmatpush1.bf16.msra.mxu0 0
    %802 = vmatprep.subr.bf16.mxu0 0
    %803 = vmatpush1.bf16.msra.mxu0 0
    %804 = vmatprep.subr.bf16.mxu0 0
    %805 = vmatpush1.bf16.msra.mxu0 0
    %806 = vmatprep.subr.bf16.mxu0 0
    %807 = vmatpush1.bf16.msra.mxu0 0
    %808 = vmatprep.mubr.bf16.mxu0 0
    %809 = vmatmul.mubr.bf16.gmra.mrb[0].mxu0 %v775
    %v810 = vpop.f32.mrb[0].mxu0
    %v811 = vadd.f32 0.0, %v810
    %v812 = vpop.f32.mrb[0].mxu0
    %v813 = vadd.f32 0.0, %v812
    %v814 = vpop.f32.mrb[0].mxu0
    %v815 = vpop.f32.mrb[0].mxu0
    %816 = vdwg.mxu0
    %817 = vmatprep.subr.bf16.mxu0 0
    %818 = vmatpush1.bf16.msra.mxu0 %v175
    %819 = vmatprep.subr.bf16.mxu0 0
    %820 = vmatpush1.bf16.msra.mxu0 %v178
    %821 = vmatprep.subr.bf16.mxu0 0
    %822 = vmatpush1.bf16.msra.mxu0 %v181
    %823 = vmatprep.subr.bf16.mxu0 0
    %824 = vmatpush1.bf16.msra.mxu0 %v184
    %825 = vmatprep.subr.bf16.mxu0 0
    %826 = vmatpush1.bf16.msra.mxu0 %v187
    %827 = vmatprep.subr.bf16.mxu0 0
    %828 = vmatpush1.bf16.msra.mxu0 %v190
    %829 = vmatprep.subr.bf16.mxu0 0
    %830 = vmatpush1.bf16.msra.mxu0 %v193
    %831 = vmatprep.subr.bf16.mxu0 0
    %832 = vmatpush1.bf16.msra.mxu0 %v196
    %833 = vmatprep.subr.bf16.mxu0 0
    %834 = vmatpush1.bf16.msra.mxu0 0
    %835 = vmatprep.subr.bf16.mxu0 0
    %836 = vmatpush1.bf16.msra.mxu0 0
    %837 = vmatprep.subr.bf16.mxu0 0
    %838 = vmatpush1.bf16.msra.mxu0 0
    %839 = vmatprep.subr.bf16.mxu0 0
    %840 = vmatpush1.bf16.msra.mxu0 0
    %841 = vmatprep.subr.bf16.mxu0 0
    %842 = vmatpush1.bf16.msra.mxu0 0
    %843 = vmatprep.subr.bf16.mxu0 0
    %844 = vmatpush1.bf16.msra.mxu0 0
    %845 = vmatprep.subr.bf16.mxu0 0
    %846 = vmatpush1.bf16.msra.mxu0 0
    %847 = vmatprep.subr.bf16.mxu0 0
    %848 = vmatpush1.bf16.msra.mxu0 0
    %849 = vmatprep.mubr.bf16.mxu0 0
    %850 = vmatmul.mubr.bf16.gmra.mrb[0].mxu0 %v775
    %v851 = vpop.f32.mrb[0].mxu0
    %v852 = vadd.f32 0.0, %v851
    %v853 = vpop.f32.mrb[0].mxu0
    %v854 = vpop.f32.mrb[0].mxu0
    %v855 = vpop.f32.mrb[0].mxu0
    %856 = vdwg.mxu0
    %v857 = vadd.f32 %v774, %v811
    %v858 = vmul.f32 %v857, 0.5
    %v859 = vtanh.pop %v858
    %v860 = vadd.f32 %v859, 1.0
    %v861 = vmul.f32 %v860, 0.5
    %v863 = vrot.slane %v774, 2
    %v865 = vadd.f32 %v863, %v813
    %v866 = vmul.f32 %v865, 0.5
    %v867 = vtanh.pop %v866
    %v868 = vadd.f32 %v867, 1.0
    %v869 = vmul.f32 %v868, 0.5
    %v870 = vadd.f32 %v852, %v319
    %v871 = vmul.f32 %v861, %v870
    %v872 = vrot.slane %v774, 4
    %v874 = vadd.f32 %v872, %v871
    %v875 = vtanh.pop %v874
    %v876 = vsub.f32 1.0, %v869
    %v877 = vmul.f32 %v876, %v875
    %v878 = vmul.f32 %v869, %v769
    %v879 = vadd.f32 %v877, %v878
    %s880 = scalar_lea.vmem [#allocation8], 10
    %881 = vst [vmem:[%s880] sm:$0x3] %v879
    %s882 = scalar_lea.vmem [#allocation3], 18
    %v883 = vld [vmem:[%s882] sm:$0x7]
    %v884 = vunpack.c.l.bf16 %v883
    %v885 = vpack.c.bf16 %v879, %v879
    %886 = vmatprep.subr.bf16.mxu0 %v174
    %887 = vmatpush1.bf16.msra.mxu0 %v173
    %888 = vmatprep.subr.bf16.mxu0 %v177
    %889 = vmatpush1.bf16.msra.mxu0 %v176
    %890 = vmatprep.subr.bf16.mxu0 %v180
    %891 = vmatpush1.bf16.msra.mxu0 %v179
    %892 = vmatprep.subr.bf16.mxu0 %v183
    %893 = vmatpush1.bf16.msra.mxu0 %v182
    %894 = vmatprep.subr.bf16.mxu0 %v186
    %895 = vmatpush1.bf16.msra.mxu0 %v185
    %896 = vmatprep.subr.bf16.mxu0 %v189
    %897 = vmatpush1.bf16.msra.mxu0 %v188
    %898 = vmatprep.subr.bf16.mxu0 %v192
    %899 = vmatpush1.bf16.msra.mxu0 %v191
    %900 = vmatprep.subr.bf16.mxu0 %v195
    %901 = vmatpush1.bf16.msra.mxu0 %v194
    %902 = vmatprep.subr.bf16.mxu0 0
    %903 = vmatpush1.bf16.msra.mxu0 0
    %904 = vmatprep.subr.bf16.mxu0 0
    %905 = vmatpush1.bf16.msra.mxu0 0
    %906 = vmatprep.subr.bf16.mxu0 0
    %907 = vmatpush1.bf16.msra.mxu0 0
    %908 = vmatprep.subr.bf16.mxu0 0
    %909 = vmatpush1.bf16.msra.mxu0 0
    %910 = vmatprep.subr.bf16.mxu0 0
    %911 = vmatpush1.bf16.msra.mxu0 0
    %912 = vmatprep.subr.bf16.mxu0 0
    %913 = vmatpush1.bf16.msra.mxu0 0
    %914 = vmatprep.subr.bf16.mxu0 0
    %915 = vmatpush1.bf16.msra.mxu0 0
    %916 = vmatprep.subr.bf16.mxu0 0
    %917 = vmatpush1.bf16.msra.mxu0 0
    %918 = vmatprep.mubr.bf16.mxu0 0
    %919 = vmatmul.mubr.bf16.gmra.mrb[0].mxu0 %v885
    %v920 = vpop.f32.mrb[0].mxu0
    %v921 = vadd.f32 0.0, %v920
    %v922 = vpop.f32.mrb[0].mxu0
    %v923 = vadd.f32 0.0, %v922
    %v924 = vpop.f32.mrb[0].mxu0
    %v925 = vpop.f32.mrb[0].mxu0
    %926 = vdwg.mxu0
    %927 = vmatprep.subr.bf16.mxu0 0
    %928 = vmatpush1.bf16.msra.mxu0 %v175
    %929 = vmatprep.subr.bf16.mxu0 0
    %930 = vmatpush1.bf16.msra.mxu0 %v178
    %931 = vmatprep.subr.bf16.mxu0 0
    %932 = vmatpush1.bf16.msra.mxu0 %v181
    %933 = vmatprep.subr.bf16.mxu0 0
    %934 = vmatpush1.bf16.msra.mxu0 %v184
    %935 = vmatprep.subr.bf16.mxu0 0
    %936 = vmatpush1.bf16.msra.mxu0 %v187
    %937 = vmatprep.subr.bf16.mxu0 0
    %938 = vmatpush1.bf16.msra.mxu0 %v190
    %939 = vmatprep.subr.bf16.mxu0 0
    %940 = vmatpush1.bf16.msra.mxu0 %v193
    %941 = vmatprep.subr.bf16.mxu0 0
    %942 = vmatpush1.bf16.msra.mxu0 %v196
    %943 = vmatprep.subr.bf16.mxu0 0
    %944 = vmatpush1.bf16.msra.mxu0 0
    %945 = vmatprep.subr.bf16.mxu0 0
    %946 = vmatpush1.bf16.msra.mxu0 0
    %947 = vmatprep.subr.bf16.mxu0 0
    %948 = vmatpush1.bf16.msra.mxu0 0
    %949 = vmatprep.subr.bf16.mxu0 0
    %950 = vmatpush1.bf16.msra.mxu0 0
    %951 = vmatprep.subr.bf16.mxu0 0
    %952 = vmatpush1.bf16.msra.mxu0 0
    %953 = vmatprep.subr.bf16.mxu0 0
    %954 = vmatpush1.bf16.msra.mxu0 0
    %955 = vmatprep.subr.bf16.mxu0 0
    %956 = vmatpush1.bf16.msra.mxu0 0
    %957 = vmatprep.subr.bf16.mxu0 0
    %958 = vmatpush1.bf16.msra.mxu0 0
    %959 = vmatprep.mubr.bf16.mxu0 0
    %960 = vmatmul.mubr.bf16.gmra.mrb[0].mxu0 %v885
    %v961 = vpop.f32.mrb[0].mxu0
    %v962 = vadd.f32 0.0, %v961
    %v963 = vpop.f32.mrb[0].mxu0
    %v964 = vpop.f32.mrb[0].mxu0
    %v965 = vpop.f32.mrb[0].mxu0
    %966 = vdwg.mxu0
    %v967 = vadd.f32 %v884, %v921
    %v968 = vmul.f32 %v967, 0.5
    %v969 = vtanh.pop %v968
    %v970 = vadd.f32 %v969, 1.0
    %v971 = vmul.f32 %v970, 0.5
    %v973 = vrot.slane %v884, 2
    %v975 = vadd.f32 %v973, %v923
    %v976 = vmul.f32 %v975, 0.5
    %v977 = vtanh.pop %v976
    %v978 = vadd.f32 %v977, 1.0
    %v979 = vmul.f32 %v978, 0.5
    %v980 = vadd.f32 %v962, %v319
    %v981 = vmul.f32 %v971, %v980
    %v982 = vrot.slane %v884, 4
    %v984 = vadd.f32 %v982, %v981
    %v985 = vtanh.pop %v984
    %v986 = vsub.f32 1.0, %v979
    %v987 = vmul.f32 %v986, %v985
    %v988 = vmul.f32 %v979, %v879
    %v989 = vadd.f32 %v987, %v988
    %s990 = scalar_lea.vmem [#allocation8], 12
    %991 = vst [vmem:[%s990] sm:$0x3] %v989
    %s992 = scalar_lea.vmem [#allocation3], 21
    %v993 = vld [vmem:[%s992] sm:$0x7]
    %v994 = vunpack.c.l.bf16 %v993
    %v995 = vpack.c.bf16 %v989, %v989
    %996 = vmatprep.subr.bf16.mxu0 %v174
    %997 = vmatpush1.bf16.msra.mxu0 %v173
    %998 = vmatprep.subr.bf16.mxu0 %v177
    %999 = vmatpush1.bf16.msra.mxu0 %v176
    %1000 = vmatprep.subr.bf16.mxu0 %v180
    %1001 = vmatpush1.bf16.msra.mxu0 %v179
    %1002 = vmatprep.subr.bf16.mxu0 %v183
    %1003 = vmatpush1.bf16.msra.mxu0 %v182
    %1004 = vmatprep.subr.bf16.mxu0 %v186
    %1005 = vmatpush1.bf16.msra.mxu0 %v185
    %1006 = vmatprep.subr.bf16.mxu0 %v189
    %1007 = vmatpush1.bf16.msra.mxu0 %v188
    %1008 = vmatprep.subr.bf16.mxu0 %v192
    %1009 = vmatpush1.bf16.msra.mxu0 %v191
    %1010 = vmatprep.subr.bf16.mxu0 %v195
    %1011 = vmatpush1.bf16.msra.mxu0 %v194
    %1012 = vmatprep.subr.bf16.mxu0 0
    %1013 = vmatpush1.bf16.msra.mxu0 0
    %1014 = vmatprep.subr.bf16.mxu0 0
    %1015 = vmatpush1.bf16.msra.mxu0 0
    %1016 = vmatprep.subr.bf16.mxu0 0
    %1017 = vmatpush1.bf16.msra.mxu0 0
    %1018 = vmatprep.subr.bf16.mxu0 0
    %1019 = vmatpush1.bf16.msra.mxu0 0
    %1020 = vmatprep.subr.bf16.mxu0 0
    %1021 = vmatpush1.bf16.msra.mxu0 0
    %1022 = vmatprep.subr.bf16.mxu0 0
    %1023 = vmatpush1.bf16.msra.mxu0 0
    %1024 = vmatprep.subr.bf16.mxu0 0
    %1025 = vmatpush1.bf16.msra.mxu0 0
    %1026 = vmatprep.subr.bf16.mxu0 0
    %1027 = vmatpush1.bf16.msra.mxu0 0
    %1028 = vmatprep.mubr.bf16.mxu0 0
    %1029 = vmatmul.mubr.bf16.gmra.mrb[0].mxu0 %v995
    %v1030 = vpop.f32.mrb[0].mxu0
    %v1031 = vadd.f32 0.0, %v1030
    %v1032 = vpop.f32.mrb[0].mxu0
    %v1033 = vadd.f32 0.0, %v1032
    %v1034 = vpop.f32.mrb[0].mxu0
    %v1035 = vpop.f32.mrb[0].mxu0
    %1036 = vdwg.mxu0
    %1037 = vmatprep.subr.bf16.mxu0 0
    %1038 = vmatpush1.bf16.msra.mxu0 %v175
    %1039 = vmatprep.subr.bf16.mxu0 0
    %1040 = vmatpush1.bf16.msra.mxu0 %v178
    %1041 = vmatprep.subr.bf16.mxu0 0
    %1042 = vmatpush1.bf16.msra.mxu0 %v181
    %1043 = vmatprep.subr.bf16.mxu0 0
    %1044 = vmatpush1.bf16.msra.mxu0 %v184
    %1045 = vmatprep.subr.bf16.mxu0 0
    %1046 = vmatpush1.bf16.msra.mxu0 %v187
    %1047 = vmatprep.subr.bf16.mxu0 0
    %1048 = vmatpush1.bf16.msra.mxu0 %v190
    %1049 = vmatprep.subr.bf16.mxu0 0
    %1050 = vmatpush1.bf16.msra.mxu0 %v193
    %1051 = vmatprep.subr.bf16.mxu0 0
    %1052 = vmatpush1.bf16.msra.mxu0 %v196
    %1053 = vmatprep.subr.bf16.mxu0 0
    %1054 = vmatpush1.bf16.msra.mxu0 0
    %1055 = vmatprep.subr.bf16.mxu0 0
    %1056 = vmatpush1.bf16.msra.mxu0 0
    %1057 = vmatprep.subr.bf16.mxu0 0
    %1058 = vmatpush1.bf16.msra.mxu0 0
    %1059 = vmatprep.subr.bf16.mxu0 0
    %1060 = vmatpush1.bf16.msra.mxu0 0
    %1061 = vmatprep.subr.bf16.mxu0 0
    %1062 = vmatpush1.bf16.msra.mxu0 0
    %1063 = vmatprep.subr.bf16.mxu0 0
    %1064 = vmatpush1.bf16.msra.mxu0 0
    %1065 = vmatprep.subr.bf16.mxu0 0
    %1066 = vmatpush1.bf16.msra.mxu0 0
    %1067 = vmatprep.subr.bf16.mxu0 0
    %1068 = vmatpush1.bf16.msra.mxu0 0
    %1069 = vmatprep.mubr.bf16.mxu0 0
    %1070 = vmatmul.mubr.bf16.gmra.mrb[0].mxu0 %v995
    %v1071 = vpop.f32.mrb[0].mxu0
    %v1072 = vadd.f32 0.0, %v1071
    %v1073 = vpop.f32.mrb[0].mxu0
    %v1074 = vpop.f32.mrb[0].mxu0
    %v1075 = vpop.f32.mrb[0].mxu0
    %1076 = vdwg.mxu0
    %v1077 = vadd.f32 %v994, %v1031
    %v1078 = vmul.f32 %v1077, 0.5
    %v1079 = vtanh.pop %v1078
    %v1080 = vadd.f32 %v1079, 1.0
    %v1081 = vmul.f32 %v1080, 0.5
    %v1083 = vrot.slane %v994, 2
    %v1085 = vadd.f32 %v1083, %v1033
    %v1086 = vmul.f32 %v1085, 0.5
    %v1087 = vtanh.pop %v1086
    %v1088 = vadd.f32 %v1087, 1.0
    %v1089 = vmul.f32 %v1088, 0.5
    %v1090 = vadd.f32 %v1072, %v319
    %v1091 = vmul.f32 %v1081, %v1090
    %v1092 = vrot.slane %v994, 4
    %v1094 = vadd.f32 %v1092, %v1091
    %v1095 = vtanh.pop %v1094
    %v1096 = vsub.f32 1.0, %v1089
    %v1097 = vmul.f32 %v1096, %v1095
    %v1098 = vmul.f32 %v1089, %v989
    %v1099 = vadd.f32 %v1097, %v1098
    %s1100 = scalar_lea.vmem [#allocation8], 14
    %1101 = vst [vmem:[%s1100] sm:$0x3] %v1099
    %1102 = vst [vmem:[#allocation2] sm:$0x3] %v1099
    // Predicated region
    $region30: #{tpu_custom_call.1} parent=1 // pred_check
      %p1103 = pneg %p50
    $region31: #{tpu_custom_call.1} parent=1 // pred_check_branch
      %1105 = sbr.rel (%p1103) target = $region33
    $region32: #{tpu_custom_call.1} parent=1 // pred_region
      %1106 = vst [vmem:[#allocation9] sm:$0x3] %v1099
    $region33: #{tpu_custom_call.1} parent=1 // pred_fallthru
      _
    // Predicated region
    $region34: #{tpu_custom_call.1} parent=1 // pred_check
      _
    $region35: #{tpu_custom_call.1} parent=1 // pred_check_branch
      %1108 = sbr.rel (0) target = $region37
    $region36: #{tpu_custom_call.1} parent=1 // pred_region
      %s1110 = ssub.s32 256, 256
      %1111 = vsyncadd [#allocation5], %s1110
      %s1112 = sshll.u32 [#allocation8], 4
      %s1113 = int_to_ptr.vmem [resolvable:$true] %s1112
      %1118 = dma.vmem_to_hbm [thread:$0]  %s1113, 256, %s4, [#allocation5], 32, 32, 2
    $region37: #{tpu_custom_call.1} parent=1 // pred_fallthru
      _
    // Predicated region
    $region38: #{tpu_custom_call.1} parent=1 // pred_check
      _
    $region39: #{tpu_custom_call.1} parent=1 // pred_check_branch
      %1120 = sbr.rel (0) target = $region41
    $region40: #{tpu_custom_call.1} parent=1 // pred_region
      %s1122 = ssub.s32 32, 32
      %1123 = vsyncadd [#allocation10], %s1122
      %s1125 = sshll.u32 [#allocation9], 4
      %s1126 = int_to_ptr.vmem [resolvable:$true] %s1125
      %1128 = dma.vmem_to_hbm [thread:$0]  %s1126, 32, %s5, [#allocation10]
    $region41: #{tpu_custom_call.1} parent=1 // pred_fallthru
      _
    // Predicated region
    $region42: #{tpu_custom_call.1} parent=1 // pred_check
      _
    $region43: #{tpu_custom_call.1} parent=1 // pred_check_branch
      %1130 = sbr.rel (0) target = $region45
    $region44: #{tpu_custom_call.1} parent=1 // pred_region
      %1131 = dma.done [#allocation5], 256
    $region45: #{tpu_custom_call.1} parent=1 // pred_fallthru
      _
    // Predicated region
    $region46: #{tpu_custom_call.1} parent=1 // pred_check
      _
    $region47: #{tpu_custom_call.1} parent=1 // pred_check_branch
      %1133 = sbr.rel (0) target = $region49
    $region48: #{tpu_custom_call.1} parent=1 // pred_region
      %1134 = dma.done [#allocation10], 32
    $region49: #{tpu_custom_call.1} parent=1 // pred_fallthru
      _
    %1135 = vsyncpa [#allocation4], 1
    %1136 = vsyncpa [#allocation7], 1
    %1137 = vsyncpa [#allocation5], 1
    %1138 = vsyncpa [#allocation10], 1

</llo_original>
